<compile_context>
chip_gen: v5e
topology: v5e:2x2
jax: 0.10.0
libtpu: 0.0.40
codegen_flags: <defaults>
</compile_context>

<pallas_src>
import functools
import math

import jax
import jax.numpy as jnp
from jax.experimental import pallas as pl
from jax.experimental.pallas import tpu as pltpu


def _round_up(x, m):
    return -(-x // m) * m


def _tpu_config():
    """Generation-aware VMEM budget / row-tile preferences."""
    try:
        kind = jax.devices()[0].device_kind.lower()
    except Exception:  # pragma: no cover - defensive
        kind = ""
    if "v6" in kind:
        # 128 MiB VMEM, highest FLOPs:BW ratio -> biggest row tile.
        return dict(vmem_bytes=128 << 20, dual_core=False,
                    tm_prefs=(1024, 512, 256, 128, 64, 32, 16, 8))
    if "v7" in kind:
        # 64 MiB VMEM, 2 TensorCores per chip.
        return dict(vmem_bytes=64 << 20, dual_core=True,
                    tm_prefs=(512, 256, 128, 64, 32, 16, 8))
    if "v5p" in kind or "v4" in kind:
        return dict(vmem_bytes=128 << 20, dual_core=True,
                    tm_prefs=(512, 256, 128, 64, 32, 16, 8))
    if "v5" in kind:  # v5e / v5 lite
        return dict(vmem_bytes=128 << 20, dual_core=False,
                    tm_prefs=(512, 256, 128, 64, 32, 16, 8))
    if "v3" in kind or "v2" in kind:
        return dict(vmem_bytes=16 << 20, dual_core=False,
                    tm_prefs=(256, 128, 64, 32, 16, 8))
    # Unknown: conservative budget.
    return dict(vmem_bytes=64 << 20, dual_core=False,
                tm_prefs=(512, 256, 128, 64, 32, 16, 8))


def _vmem_footprint(tm, ti, H):
    """Approximate scoped-VMEM bytes: double-buffered blocks + f32 acc + temps."""
    bf = 2  # bf16
    x_blk = tm * H * bf * 2
    wgu_blk = H * (2 * ti) * bf * 2
    wd_blk = ti * H * bf * 2
    out_blk = tm * H * bf * 2
    acc = tm * H * 4
    tmp = tm * (2 * ti) * 4 + 2 * tm * ti * 4  # f32 gu result + SiLU temps
    return x_blk + wgu_blk + wd_blk + out_blk + acc + tmp


def _choose_tiles(M, H, I):
    cfg = _tpu_config()

    # Intermediate tile: lane-aligned (multiple of 128), capped at 512.
    ti = min(512, _round_up(min(I, 512), 128))

    # Row tile: largest preference whose zero-padding waste stays bounded.
    tm = None
    for c in cfg["tm_prefs"]:
        if _round_up(M, c) - M <= max(M // 4, 64):
            tm = c
            break
    if tm is None:
        tm = _round_up(M, 8)

    # Dual-TensorCore chips: keep >= 2 row tiles so the 'parallel' axis shards.
    if cfg["dual_core"]:
        while tm > 128 and _round_up(M, tm) // tm < 2:
            tm //= 2

    # Shrink tiles until the footprint fits the generation's VMEM budget.
    budget = int(cfg["vmem_bytes"] * 0.85)
    while _vmem_footprint(tm, ti, H) > budget and (tm > 128 or ti > 128):
        if tm >= ti and tm > 128:
            tm //= 2
        elif ti > 128:
            ti //= 2
        else:
            break

    footprint = _vmem_footprint(tm, ti, H)
    vmem_limit = int(min(cfg["vmem_bytes"] * 0.9,
                         max(footprint + (16 << 20), 32 << 20)))
    vmem_limit = max(vmem_limit, footprint)
    return tm, ti, vmem_limit


def _llama_mlp_kernel(x_ref, wgu_ref, wd_ref, o_ref, acc_ref, *, ti):
    j = pl.program_id(1)

    @pl.when(j == 0)
    def _():
        acc_ref[...] = jnp.zeros_like(acc_ref)

    x = x_ref[...]
    # Fused gate|up projection for this intermediate tile: one bf16 MXU matmul,
    # f32 accumulation.  Slices below are lane-aligned (ti % 128 == 0).
    gu = jnp.dot(x, wgu_ref[...], preferred_element_type=jnp.float32)
    g = gu[:, :ti]
    u = gu[:, ti:]
    # SiLU(g) * u: exp and approx-reciprocal go to the EUP slot.
    h = g * pl.reciprocal(1.0 + jnp.exp(-g), approx=True) * u
    # Partial down projection (bf16 MXU inputs), accumulated across j tiles.
    acc_ref[...] += jnp.dot(
        h.astype(wd_ref.dtype), wd_ref[...], preferred_element_type=jnp.float32
    )

    @pl.when(j == pl.num_programs(1) - 1)
    def _():
        o_ref[...] = acc_ref[...].astype(o_ref.dtype)


@functools.partial(jax.jit, static_argnames=("tm", "ti", "Mp", "Ip", "vmem_limit"))
def _mlp_impl(x, gate_proj, up_proj, down_proj, *, tm, ti, Mp, Ip, vmem_limit):
    B, S, H = x.shape
    I = gate_proj.shape[1]
    M = B * S
    out_dtype = x.dtype

    # bf16 MXU operands (f32 accumulation inside the kernel); also halves the
    # dominant weight HBM traffic.
    xb = x.reshape(M, H).astype(jnp.bfloat16)
    wg = gate_proj.astype(jnp.bfloat16)
    wu = up_proj.astype(jnp.bfloat16)
    wd = down_proj.astype(jnp.bfloat16)

    # Zero-pad M / I to tile multiples: padded rows are sliced off, padded
    # intermediate columns/rows contribute SiLU(0)*0 = 0 -> identical numerics.
    if Mp != M:
        xb = jnp.pad(xb, ((0, Mp - M), (0, 0)))
    if Ip != I:
        wg = jnp.pad(wg, ((0, 0), (0, Ip - I)))
        wu = jnp.pad(wu, ((0, 0), (0, Ip - I)))
        wd = jnp.pad(wd, ((0, Ip - I), (0, 0)))

    # Pack gate/up per ti-tile so each grid step streams a single (H, 2*ti)
    # slab and does one MXU matmul.  (In production this packing would happen
    # once at weight-load time.)
    nI = Ip // ti
    wgu = jnp.concatenate(
        [wg.reshape(H, nI, ti), wu.reshape(H, nI, ti)], axis=2
    ).reshape(H, 2 * Ip)

    grid = (Mp // tm, nI)
    out = pl.pallas_call(
        functools.partial(_llama_mlp_kernel, ti=ti),
        out_shape=jax.ShapeDtypeStruct((Mp, H), out_dtype),
        grid_spec=pltpu.PrefetchScalarGridSpec(
            num_scalar_prefetch=0,
            grid=grid,
            in_specs=[
                pl.BlockSpec((tm, H), lambda i, j: (i, 0)),      # x rows
                pl.BlockSpec((H, 2 * ti), lambda i, j: (0, j)),  # [gate|up] tile
                pl.BlockSpec((ti, H), lambda i, j: (j, 0)),      # down_proj tile
            ],
            out_specs=pl.BlockSpec((tm, H), lambda i, j: (i, 0)),
            scratch_shapes=[pltpu.VMEM((tm, H), jnp.float32)],
        ),
        compiler_params=pltpu.CompilerParams(
            dimension_semantics=("parallel", "arbitrary"),
            vmem_limit_bytes=vmem_limit,
        ),
    )(xb, wgu, wd)

    if Mp != M:
        out = out[:M]
    return out.reshape(B, S, H)


def llama_mlp_forward(x, gate_proj, up_proj, down_proj):
    """Pallas LlamaMLP.forward: down_proj( SiLU(x @ gate_proj) * (x @ up_proj) )."""
    B, S, H = x.shape
    I = gate_proj.shape[1]
    M = B * S
    tm, ti, vmem_limit = _choose_tiles(M, H, I)
    Mp = _round_up(M, tm)
    Ip = _round_up(I, ti)
    return _mlp_impl(x, gate_proj, up_proj, down_proj,
                     tm=tm, ti=ti, Mp=Mp, Ip=Ip, vmem_limit=vmem_limit)


if __name__ == "__main__":
    # Small but MXU/lane-aligned shapes consistent with the module.
    B, S, H, I = 2, 64, 256, 512
    key = jax.random.PRNGKey(0)
    kx, kg, ku, kd = jax.random.split(key, 4)

    x = jax.random.normal(kx, (B, S, H), dtype=jnp.float32)

    # kaiming_uniform_(a=sqrt(5)) on a 2-D tensor -> U(-1/sqrt(fan_in), 1/sqrt(fan_in)),
    # with PyTorch fan_in = tensor.size(1).
    bg = 1.0 / math.sqrt(I)
    gate_proj = jax.random.uniform(kg, (H, I), minval=-bg, maxval=bg, dtype=jnp.float32)
    up_proj = jax.random.uniform(ku, (H, I), minval=-bg, maxval=bg, dtype=jnp.float32)
    bd = 1.0 / math.sqrt(H)
    down_proj = jax.random.uniform(kd, (I, H), minval=-bd, maxval=bd, dtype=jnp.float32)

    y = llama_mlp_forward(x, gate_proj, up_proj, down_proj)
    y = jax.block_until_ready(y)

    # Pure-JAX reference (f32).
    g = jnp.einsum("bsh,hi->bsi", x, gate_proj)
    u = jnp.einsum("bsh,hi->bsi", x, up_proj)
    h = g * jax.nn.sigmoid(g) * u
    y_ref = jnp.einsum("bsi,ih->bsh", h, down_proj)

    assert y.shape == x.shape and y.dtype == x.dtype
    err = float(jnp.max(jnp.abs(y - y_ref)))
    # bf16 MXU inputs + approx reciprocal -> loose tolerance vs. f32 reference.
    assert bool(jnp.allclose(y, y_ref, atol=2e-2, rtol=2e-2)), f"max abs err={err}"
    print("KERNEL_OK")
</pallas_src>

<mosaic_0001>
module attributes {stable_mosaic.version = 11 : i64} {
  func.func @_llama_mlp_kernel(%arg0: i32, %arg1: i32, %arg2: memref<128x256xbf16, #tpu.memory_space<vmem>>, %arg3: memref<256x1024xbf16, #tpu.memory_space<vmem>>, %arg4: memref<512x256xbf16, #tpu.memory_space<vmem>>, %arg5: memref<128x256xf32, #tpu.memory_space<vmem>>, %arg6: memref<128x256xf32, #tpu.memory_space<vmem>>) attributes {dimension_semantics = [#tpu.dimension_semantics<parallel>, #tpu.dimension_semantics<arbitrary>], iteration_bounds = array<i64: 1, 1>, scalar_prefetch = 0 : i64, scratch_operands = 1 : i64, tpu.core_type = #tpu.core_type<tc>, window_params = [{transform_indices = @transform_0, window_bounds = array<i64: 128, 256>}, {transform_indices = @transform_1, window_bounds = array<i64: 256, 1024>}, {transform_indices = @transform_2, window_bounds = array<i64: 512, 256>}, {transform_indices = @transform_3, window_bounds = array<i64: 128, 256>}]} {
    %c0_i32 = arith.constant 0 : i32
    %0 = arith.cmpi eq, %arg1, %c0_i32 : i32
    %1 = arith.extui %0 : i1 to i32
    %c0_i32_0 = arith.constant 0 : i32
    %2 = arith.cmpi ne, %1, %c0_i32_0 : i32
    scf.if %2 {
      %cst_15 = arith.constant 0.000000e+00 : f32
      %25 = vector.broadcast %cst_15 : f32 to vector<128x256xf32>
      %c0_16 = arith.constant 0 : index
      %c0_17 = arith.constant 0 : index
      %26 = vector.load %arg6[%c0_16, %c0_17] : memref<128x256xf32, #tpu.memory_space<vmem>>, vector<128x256xf32>
      tpu.vector_store %arg6[%c0_16, %c0_17], %25 {strides = array<i32>} : memref<128x256xf32, #tpu.memory_space<vmem>>, vector<128x256xf32>,
    } else {
    }
    %c0 = arith.constant 0 : index
    %c0_1 = arith.constant 0 : index
    %3 = vector.load %arg2[%c0, %c0_1] : memref<128x256xbf16, #tpu.memory_space<vmem>>, vector<128x256xbf16>
    %c0_2 = arith.constant 0 : index
    %c0_3 = arith.constant 0 : index
    %4 = vector.load %arg3[%c0_2, %c0_3] : memref<256x1024xbf16, #tpu.memory_space<vmem>>, vector<256x1024xbf16>
    %cst = arith.constant dense<0.000000e+00> : vector<128x1024xf32>
    %5 = tpu.matmul %3, %4, %cst {dimension_numbers = #tpu.dot_dimension_numbers<[1], [0], [0], [1], [0, 0, 1, 1], [], []>} : vector<128x256xbf16>, vector<256x1024xbf16>, vector<128x1024xf32> -> vector<128x1024xf32>
    %6 = vector.extract_strided_slice %5 {offsets = [0, 0], sizes = [128, 512], strides = [1, 1]} : vector<128x1024xf32> to vector<128x512xf32>
    %7 = vector.extract_strided_slice %5 {offsets = [0, 512], sizes = [128, 512], strides = [1, 1]} : vector<128x1024xf32> to vector<128x512xf32>
    %cst_4 = arith.constant 0.000000e+00 : f32
    %8 = vector.broadcast %cst_4 : f32 to vector<128x512xf32>
    %9 = arith.subf %8, %6 : vector<128x512xf32>
    %10 = math.exp %9 : vector<128x512xf32>
    %cst_5 = arith.constant 1.000000e+00 : f32
    %11 = vector.broadcast %cst_5 : f32 to vector<128x512xf32>
    %12 = arith.addf %11, %10 : vector<128x512xf32>
    %13 = tpu.reciprocal %12 {approx = true} : vector<128x512xf32> -> vector<128x512xf32>
    %14 = arith.mulf %6, %13 : vector<128x512xf32>
    %15 = arith.mulf %14, %7 : vector<128x512xf32>
    %c0_6 = arith.constant 0 : index
    %c0_7 = arith.constant 0 : index
    %16 = vector.load %arg6[%c0_6, %c0_7] : memref<128x256xf32, #tpu.memory_space<vmem>>, vector<128x256xf32>
    %17 = arith.truncf %15 : vector<128x512xf32> to vector<128x512xbf16>
    %c0_8 = arith.constant 0 : index
    %c0_9 = arith.constant 0 : index
    %18 = vector.load %arg4[%c0_8, %c0_9] : memref<512x256xbf16, #tpu.memory_space<vmem>>, vector<512x256xbf16>
    %cst_10 = arith.constant dense<0.000000e+00> : vector<128x256xf32>
    %19 = tpu.matmul %17, %18, %cst_10 {dimension_numbers = #tpu.dot_dimension_numbers<[1], [0], [0], [1], [0, 0, 1, 1], [], []>} : vector<128x512xbf16>, vector<512x256xbf16>, vector<128x256xf32> -> vector<128x256xf32>
    %20 = arith.addf %16, %19 : vector<128x256xf32>
    %c0_11 = arith.constant 0 : index
    %c0_12 = arith.constant 0 : index
    %21 = vector.load %arg6[%c0_11, %c0_12] : memref<128x256xf32, #tpu.memory_space<vmem>>, vector<128x256xf32>
    tpu.vector_store %arg6[%c0_11, %c0_12], %20 {strides = array<i32>} : memref<128x256xf32, #tpu.memory_space<vmem>>, vector<128x256xf32>,
    %c0_i32_13 = arith.constant 0 : i32
    %22 = arith.cmpi eq, %arg1, %c0_i32_13 : i32
    %23 = arith.extui %22 : i1 to i32
    %c0_i32_14 = arith.constant 0 : i32
    %24 = arith.cmpi ne, %23, %c0_i32_14 : i32
    scf.if %24 {
      %c0_15 = arith.constant 0 : index
      %c0_16 = arith.constant 0 : index
      %25 = vector.load %arg6[%c0_15, %c0_16] : memref<128x256xf32, #tpu.memory_space<vmem>>, vector<128x256xf32>
      %c0_17 = arith.constant 0 : index
      %c0_18 = arith.constant 0 : index
      %26 = vector.load %arg5[%c0_17, %c0_18] : memref<128x256xf32, #tpu.memory_space<vmem>>, vector<128x256xf32>
      tpu.vector_store %arg5[%c0_17, %c0_18], %25 {strides = array<i32>} : memref<128x256xf32, #tpu.memory_space<vmem>>, vector<128x256xf32>,
    } else {
    }
    return
  }
  func.func @transform_0(%arg0: i32, %arg1: i32) -> (i32, i32) {
    %c0_i32 = arith.constant 0 : i32
    %c0_i32_0 = arith.constant 0 : i32
    return %arg0, %c0_i32 : i32, i32
  }
  func.func @transform_1(%arg0: i32, %arg1: i32) -> (i32, i32) {
    %c0_i32 = arith.constant 0 : i32
    %c0_i32_0 = arith.constant 0 : i32
    return %c0_i32, %arg1 : i32, i32
  }
  func.func @transform_2(%arg0: i32, %arg1: i32) -> (i32, i32) {
    %c0_i32 = arith.constant 0 : i32
    %c0_i32_0 = arith.constant 0 : i32
    return %arg1, %c0_i32 : i32, i32
  }
  func.func @transform_3(%arg0: i32, %arg1: i32) -> (i32, i32) {
    %c0_i32 = arith.constant 0 : i32
    %c0_i32_0 = arith.constant 0 : i32
    return %arg0, %c0_i32 : i32, i32
  }
}

</mosaic_0001>

<llo_original>
// kernel: _mlp_impl.1
$region0: #{_mlp_impl.1}
  #allocation0 [shape = 'u32[]', space=smem, size = 0x4, offset = 0x4, fixed_abs, tag = 'smem constant byte address 0x4 - core index']
  #allocation1 [shape = 'u32[72,128]{1,0:T(1,128)}', space=vmem, size = 0x9000, scoped, tag = 'internal scratch']
  #allocation2 [shape = 'f32[128,256]{1,0:T(8,128)}', space=vmem, size = 0x20000, scoped, tag = 'scratch operand']
  %s0 = inlined_call_operand.vmem [shape: bf16[128,256], index: 0, kind: input, shape index: {}]
  %s1 = inlined_call_operand.vmem [shape: bf16[256,1024], index: 1, kind: input, shape index: {}]
  %s2 = inlined_call_operand.vmem [shape: bf16[512,256], index: 2, kind: input, shape index: {}]
  %s3 = inlined_call_operand.hbm [shape: f32[128,256], index: 3, kind: output, shape index: {}]
  %s4 = sld [smem:[#allocation0]]
  $region30: #{_mlp_impl.1} parent=0
    _
  %s6 = ssub.s32 1, %s4
  %s7 = scalar_select 0, %s6, %s4
  $region1: #{_mlp_impl.1} parent=0
    #allocation3 [shape = 'u8[131072]{0}', space=vmem, size = 0x20000, scoped, tag = 'output window, operand 0, single buffered']
    #allocation4 [shape = 's32[1]{0}', space=sflag, size = 0x4, scoped, tag = 'scoped memory for _mlp_impl.1']
    %8 = vsyncpa [#allocation4], 0
    // Predicated region
    $region2: #{_mlp_impl.1} parent=1 // pred_check
      _
    $region3: #{_mlp_impl.1} parent=1 // pred_check_branch
      %10 = sbr.rel (0) target = $region5
    $region4: #{_mlp_impl.1} parent=1 // pred_region
      _
    $region5: #{_mlp_impl.1} parent=1 // pred_fallthru
      _
    // Predicated region
    $region6: #{_mlp_impl.1} parent=1 // pred_check
      _
    $region7: #{_mlp_impl.1} parent=1 // pred_check_branch
      %12 = sbr.rel (0) target = $region9
    $region8: #{_mlp_impl.1} parent=1 // pred_region
      _
    $region9: #{_mlp_impl.1} parent=1 // pred_fallthru
      _
    // Predicated region
    $region10: #{_mlp_impl.1} parent=1 // pred_check
      _
    $region11: #{_mlp_impl.1} parent=1 // pred_check_branch
      %14 = sbr.rel (0) target = $region13
    $region12: #{_mlp_impl.1} parent=1 // pred_region
      _
    $region13: #{_mlp_impl.1} parent=1 // pred_fallthru
      _
    %p15 = scmp.eq.s32.totalorder 0, 0
    // Predicated region
    $region14: #{_mlp_impl.1} parent=1 // pred_check
      %p16 = pneg %p15
    $region15: #{_mlp_impl.1} parent=1 // pred_check_branch
      %18 = sbr.rel (%p16) target = $region17
    $region16: #{_mlp_impl.1} parent=1 // pred_region
      %19 = vst [vmem:[#allocation2] sm:$0xff] 0.0
      %20 = vst [vmem:[#allocation2 + $0x8] sm:$0xff] 0.0
      %21 = vst [vmem:[#allocation2 + $0x10] sm:$0xff] 0.0
      %22 = vst [vmem:[#allocation2 + $0x18] sm:$0xff] 0.0
      %23 = vst [vmem:[#allocation2 + $0x20] sm:$0xff] 0.0
      %24 = vst [vmem:[#allocation2 + $0x28] sm:$0xff] 0.0
      %25 = vst [vmem:[#allocation2 + $0x30] sm:$0xff] 0.0
      %26 = vst [vmem:[#allocation2 + $0x38] sm:$0xff] 0.0
      %27 = vst [vmem:[#allocation2 + $0x40] sm:$0xff] 0.0
      %28 = vst [vmem:[#allocation2 + $0x48] sm:$0xff] 0.0
      %29 = vst [vmem:[#allocation2 + $0x50] sm:$0xff] 0.0
      %30 = vst [vmem:[#allocation2 + $0x58] sm:$0xff] 0.0
      %31 = vst [vmem:[#allocation2 + $0x60] sm:$0xff] 0.0
      %32 = vst [vmem:[#allocation2 + $0x68] sm:$0xff] 0.0
      %33 = vst [vmem:[#allocation2 + $0x70] sm:$0xff] 0.0
      %34 = vst [vmem:[#allocation2 + $0x78] sm:$0xff] 0.0
      %35 = vst [vmem:[#allocation2 + $0x80] sm:$0xff] 0.0
      %36 = vst [vmem:[#allocation2 + $0x88] sm:$0xff] 0.0
      %37 = vst [vmem:[#allocation2 + $0x90] sm:$0xff] 0.0
      %38 = vst [vmem:[#allocation2 + $0x98] sm:$0xff] 0.0
      %39 = vst [vmem:[#allocation2 + $0xa0] sm:$0xff] 0.0
      %40 = vst [vmem:[#allocation2 + $0xa8] sm:$0xff] 0.0
      %41 = vst [vmem:[#allocation2 + $0xb0] sm:$0xff] 0.0
      %42 = vst [vmem:[#allocation2 + $0xb8] sm:$0xff] 0.0
      %43 = vst [vmem:[#allocation2 + $0xc0] sm:$0xff] 0.0
      %44 = vst [vmem:[#allocation2 + $0xc8] sm:$0xff] 0.0
      %45 = vst [vmem:[#allocation2 + $0xd0] sm:$0xff] 0.0
      %46 = vst [vmem:[#allocation2 + $0xd8] sm:$0xff] 0.0
      %47 = vst [vmem:[#allocation2 + $0xe0] sm:$0xff] 0.0
      %48 = vst [vmem:[#allocation2 + $0xe8] sm:$0xff] 0.0
      %49 = vst [vmem:[#allocation2 + $0xf0] sm:$0xff] 0.0
      %50 = vst [vmem:[#allocation2 + $0xf8] sm:$0xff] 0.0
    $region17: #{_mlp_impl.1} parent=1 // pred_fallthru
      _
    %v51 = vld [vmem:[%s0] sm:$0xff]
    %v52 = vld [vmem:[%s0 + $0x8] sm:$0xff]
    %v53 = vld [vmem:[%s0 + $0x10] sm:$0xff]
    %v54 = vld [vmem:[%s0 + $0x18] sm:$0xff]
    %v55 = vld [vmem:[%s0 + $0x20] sm:$0xff]
    %v56 = vld [vmem:[%s0 + $0x28] sm:$0xff]
    %v57 = vld [vmem:[%s0 + $0x30] sm:$0xff]
    %v58 = vld [vmem:[%s0 + $0x38] sm:$0xff]
    %v59 = vld [vmem:[%s0 + $0x40] sm:$0xff]
    %v60 = vld [vmem:[%s0 + $0x48] sm:$0xff]
    %v61 = vld [vmem:[%s0 + $0x50] sm:$0xff]
    %v62 = vld [vmem:[%s0 + $0x58] sm:$0xff]
    %v63 = vld [vmem:[%s0 + $0x60] sm:$0xff]
    %v64 = vld [vmem:[%s0 + $0x68] sm:$0xff]
    %v65 = vld [vmem:[%s0 + $0x70] sm:$0xff]
    %v66 = vld [vmem:[%s0 + $0x78] sm:$0xff]
    %v67 = vld [vmem:[%s1] sm:$0xff]
    %v68 = vld [vmem:[%s1 + $0x8] sm:$0xff]
    %v69 = vld [vmem:[%s1 + $0x10] sm:$0xff]
    %v70 = vld [vmem:[%s1 + $0x18] sm:$0xff]
    %v71 = vld [vmem:[%s1 + $0x20] sm:$0xff]
    %v72 = vld [vmem:[%s1 + $0x28] sm:$0xff]
    %v73 = vld [vmem:[%s1 + $0x30] sm:$0xff]
    %v74 = vld [vmem:[%s1 + $0x38] sm:$0xff]
    %v75 = vld [vmem:[%s1 + $0x40] sm:$0xff]
    %v76 = vld [vmem:[%s1 + $0x48] sm:$0xff]
    %v77 = vld [vmem:[%s1 + $0x50] sm:$0xff]
    %v78 = vld [vmem:[%s1 + $0x58] sm:$0xff]
    %v79 = vld [vmem:[%s1 + $0x60] sm:$0xff]
    %v80 = vld [vmem:[%s1 + $0x68] sm:$0xff]
    %v81 = vld [vmem:[%s1 + $0x70] sm:$0xff]
    %v82 = vld [vmem:[%s1 + $0x78] sm:$0xff]
    %v83 = vld [vmem:[%s1 + $0x80] sm:$0xff]
    %v84 = vld [vmem:[%s1 + $0x88] sm:$0xff]
    %v85 = vld [vmem:[%s1 + $0x90] sm:$0xff]
    %v86 = vld [vmem:[%s1 + $0x98] sm:$0xff]
    %v87 = vld [vmem:[%s1 + $0xa0] sm:$0xff]
    %v88 = vld [vmem:[%s1 + $0xa8] sm:$0xff]
    %v89 = vld [vmem:[%s1 + $0xb0] sm:$0xff]
    %v90 = vld [vmem:[%s1 + $0xb8] sm:$0xff]
    %v91 = vld [vmem:[%s1 + $0xc0] sm:$0xff]
    %v92 = vld [vmem:[%s1 + $0xc8] sm:$0xff]
    %v93 = vld [vmem:[%s1 + $0xd0] sm:$0xff]
    %v94 = vld [vmem:[%s1 + $0xd8] sm:$0xff]
    %v95 = vld [vmem:[%s1 + $0xe0] sm:$0xff]
    %v96 = vld [vmem:[%s1 + $0xe8] sm:$0xff]
    %v97 = vld [vmem:[%s1 + $0xf0] sm:$0xff]
    %v98 = vld [vmem:[%s1 + $0xf8] sm:$0xff]
    %v99 = vld [vmem:[%s1 + $0x100] sm:$0xff]
    %v100 = vld [vmem:[%s1 + $0x108] sm:$0xff]
    %v101 = vld [vmem:[%s1 + $0x110] sm:$0xff]
    %v102 = vld [vmem:[%s1 + $0x118] sm:$0xff]
    %v103 = vld [vmem:[%s1 + $0x120] sm:$0xff]
    %v104 = vld [vmem:[%s1 + $0x128] sm:$0xff]
    %v105 = vld [vmem:[%s1 + $0x130] sm:$0xff]
    %v106 = vld [vmem:[%s1 + $0x138] sm:$0xff]
    %v107 = vld [vmem:[%s1 + $0x140] sm:$0xff]
    %v108 = vld [vmem:[%s1 + $0x148] sm:$0xff]
    %v109 = vld [vmem:[%s1 + $0x150] sm:$0xff]
    %v110 = vld [vmem:[%s1 + $0x158] sm:$0xff]
    %v111 = vld [vmem:[%s1 + $0x160] sm:$0xff]
    %v112 = vld [vmem:[%s1 + $0x168] sm:$0xff]
    %v113 = vld [vmem:[%s1 + $0x170] sm:$0xff]
    %v114 = vld [vmem:[%s1 + $0x178] sm:$0xff]
    %v115 = vld [vmem:[%s1 + $0x180] sm:$0xff]
    %v116 = vld [vmem:[%s1 + $0x188] sm:$0xff]
    %v117 = vld [vmem:[%s1 + $0x190] sm:$0xff]
    %v118 = vld [vmem:[%s1 + $0x198] sm:$0xff]
    %v119 = vld [vmem:[%s1 + $0x1a0] sm:$0xff]
    %v120 = vld [vmem:[%s1 + $0x1a8] sm:$0xff]
    %v121 = vld [vmem:[%s1 + $0x1b0] sm:$0xff]
    %v122 = vld [vmem:[%s1 + $0x1b8] sm:$0xff]
    %v123 = vld [vmem:[%s1 + $0x1c0] sm:$0xff]
    %v124 = vld [vmem:[%s1 + $0x1c8] sm:$0xff]
    %v125 = vld [vmem:[%s1 + $0x1d0] sm:$0xff]
    %v126 = vld [vmem:[%s1 + $0x1d8] sm:$0xff]
    %v127 = vld [vmem:[%s1 + $0x1e0] sm:$0xff]
    %v128 = vld [vmem:[%s1 + $0x1e8] sm:$0xff]
    %v129 = vld [vmem:[%s1 + $0x1f0] sm:$0xff]
    %v130 = vld [vmem:[%s1 + $0x1f8] sm:$0xff]
    %v131 = vld [vmem:[%s1 + $0x200] sm:$0xff]
    %v132 = vld [vmem:[%s1 + $0x208] sm:$0xff]
    %v133 = vld [vmem:[%s1 + $0x210] sm:$0xff]
    %v134 = vld [vmem:[%s1 + $0x218] sm:$0xff]
    %v135 = vld [vmem:[%s1 + $0x220] sm:$0xff]
    %v136 = vld [vmem:[%s1 + $0x228] sm:$0xff]
    %v137 = vld [vmem:[%s1 + $0x230] sm:$0xff]
    %v138 = vld [vmem:[%s1 + $0x238] sm:$0xff]
    %v139 = vld [vmem:[%s1 + $0x240] sm:$0xff]
    %v140 = vld [vmem:[%s1 + $0x248] sm:$0xff]
    %v141 = vld [vmem:[%s1 + $0x250] sm:$0xff]
    %v142 = vld [vmem:[%s1 + $0x258] sm:$0xff]
    %v143 = vld [vmem:[%s1 + $0x260] sm:$0xff]
    %v144 = vld [vmem:[%s1 + $0x268] sm:$0xff]
    %v145 = vld [vmem:[%s1 + $0x270] sm:$0xff]
    %v146 = vld [vmem:[%s1 + $0x278] sm:$0xff]
    %v147 = vld [vmem:[%s1 + $0x280] sm:$0xff]
    %v148 = vld [vmem:[%s1 + $0x288] sm:$0xff]
    %v149 = vld [vmem:[%s1 + $0x290] sm:$0xff]
    %v150 = vld [vmem:[%s1 + $0x298] sm:$0xff]
    %v151 = vld [vmem:[%s1 + $0x2a0] sm:$0xff]
    %v152 = vld [vmem:[%s1 + $0x2a8] sm:$0xff]
    %v153 = vld [vmem:[%s1 + $0x2b0] sm:$0xff]
    %v154 = vld [vmem:[%s1 + $0x2b8] sm:$0xff]
    %v155 = vld [vmem:[%s1 + $0x2c0] sm:$0xff]
    %v156 = vld [vmem:[%s1 + $0x2c8] sm:$0xff]
    %v157 = vld [vmem:[%s1 + $0x2d0] sm:$0xff]
    %v158 = vld [vmem:[%s1 + $0x2d8] sm:$0xff]
    %v159 = vld [vmem:[%s1 + $0x2e0] sm:$0xff]
    %v160 = vld [vmem:[%s1 + $0x2e8] sm:$0xff]
    %v161 = vld [vmem:[%s1 + $0x2f0] sm:$0xff]
    %v162 = vld [vmem:[%s1 + $0x2f8] sm:$0xff]
    %v163 = vld [vmem:[%s1 + $0x300] sm:$0xff]
    %v164 = vld [vmem:[%s1 + $0x308] sm:$0xff]
    %v165 = vld [vmem:[%s1 + $0x310] sm:$0xff]
    %v166 = vld [vmem:[%s1 + $0x318] sm:$0xff]
    %v167 = vld [vmem:[%s1 + $0x320] sm:$0xff]
    %v168 = vld [vmem:[%s1 + $0x328] sm:$0xff]
    %v169 = vld [vmem:[%s1 + $0x330] sm:$0xff]
    %v170 = vld [vmem:[%s1 + $0x338] sm:$0xff]
    %v171 = vld [vmem:[%s1 + $0x340] sm:$0xff]
    %v172 = vld [vmem:[%s1 + $0x348] sm:$0xff]
    %v173 = vld [vmem:[%s1 + $0x350] sm:$0xff]
    %v174 = vld [vmem:[%s1 + $0x358] sm:$0xff]
    %v175 = vld [vmem:[%s1 + $0x360] sm:$0xff]
    %v176 = vld [vmem:[%s1 + $0x368] sm:$0xff]
    %v177 = vld [vmem:[%s1 + $0x370] sm:$0xff]
    %v178 = vld [vmem:[%s1 + $0x378] sm:$0xff]
    %v179 = vld [vmem:[%s1 + $0x380] sm:$0xff]
    %v180 = vld [vmem:[%s1 + $0x388] sm:$0xff]
    %v181 = vld [vmem:[%s1 + $0x390] sm:$0xff]
    %v182 = vld [vmem:[%s1 + $0x398] sm:$0xff]
    %v183 = vld [vmem:[%s1 + $0x3a0] sm:$0xff]
    %v184 = vld [vmem:[%s1 + $0x3a8] sm:$0xff]
    %v185 = vld [vmem:[%s1 + $0x3b0] sm:$0xff]
    %v186 = vld [vmem:[%s1 + $0x3b8] sm:$0xff]
    %v187 = vld [vmem:[%s1 + $0x3c0] sm:$0xff]
    %v188 = vld [vmem:[%s1 + $0x3c8] sm:$0xff]
    %v189 = vld [vmem:[%s1 + $0x3d0] sm:$0xff]
    %v190 = vld [vmem:[%s1 + $0x3d8] sm:$0xff]
    %v191 = vld [vmem:[%s1 + $0x3e0] sm:$0xff]
    %v192 = vld [vmem:[%s1 + $0x3e8] sm:$0xff]
    %v193 = vld [vmem:[%s1 + $0x3f0] sm:$0xff]
    %v194 = vld [vmem:[%s1 + $0x3f8] sm:$0xff]
    %v211 = vunpack.c.l.b16 %v51
    %v212 = vunpack.c.h.b16 %v51
    %v213 = vunpack.c.l.b16 %v52
    %v214 = vunpack.c.h.b16 %v52
    %v215 = vunpack.c.l.b16 %v53
    %v216 = vunpack.c.h.b16 %v53
    %v217 = vunpack.c.l.b16 %v54
    %v218 = vunpack.c.h.b16 %v54
    %v219 = vunpack.c.l.b16 %v55
    %v220 = vunpack.c.h.b16 %v55
    %v221 = vunpack.c.l.b16 %v56
    %v222 = vunpack.c.h.b16 %v56
    %v223 = vunpack.c.l.b16 %v57
    %v224 = vunpack.c.h.b16 %v57
    %v225 = vunpack.c.l.b16 %v58
    %v226 = vunpack.c.h.b16 %v58
    %v227 = vunpack.c.l.b16 %v59
    %v228 = vunpack.c.h.b16 %v59
    %v229 = vunpack.c.l.b16 %v60
    %v230 = vunpack.c.h.b16 %v60
    %v231 = vunpack.c.l.b16 %v61
    %v232 = vunpack.c.h.b16 %v61
    %v233 = vunpack.c.l.b16 %v62
    %v234 = vunpack.c.h.b16 %v62
    %v235 = vunpack.c.l.b16 %v63
    %v236 = vunpack.c.h.b16 %v63
    %v237 = vunpack.c.l.b16 %v64
    %v238 = vunpack.c.h.b16 %v64
    %v239 = vunpack.c.l.b16 %v65
    %v240 = vunpack.c.h.b16 %v65
    %v241 = vunpack.c.l.b16 %v66
    %v242 = vunpack.c.h.b16 %v66
    %v243 = vpack.c.b16 %v213, %v211
    %v244 = vpack.c.b16 %v214, %v212
    %v245 = vpack.c.b16 %v217, %v215
    %v246 = vpack.c.b16 %v218, %v216
    %v247 = vpack.c.b16 %v221, %v219
    %v248 = vpack.c.b16 %v222, %v220
    %v249 = vpack.c.b16 %v225, %v223
    %v250 = vpack.c.b16 %v226, %v224
    %v251 = vpack.c.b16 %v229, %v227
    %v252 = vpack.c.b16 %v230, %v228
    %v253 = vpack.c.b16 %v233, %v231
    %v254 = vpack.c.b16 %v234, %v232
    %v255 = vpack.c.b16 %v237, %v235
    %v256 = vpack.c.b16 %v238, %v236
    %v257 = vpack.c.b16 %v241, %v239
    %v258 = vpack.c.b16 %v242, %v240
    %v403 = vunpack.c.l.b16 %v67
    %v404 = vunpack.c.h.b16 %v67
    %v405 = vunpack.c.l.b16 %v68
    %v406 = vunpack.c.h.b16 %v68
    %v407 = vunpack.c.l.b16 %v69
    %v408 = vunpack.c.h.b16 %v69
    %v409 = vunpack.c.l.b16 %v70
    %v410 = vunpack.c.h.b16 %v70
    %v411 = vunpack.c.l.b16 %v71
    %v412 = vunpack.c.h.b16 %v71
    %v413 = vunpack.c.l.b16 %v72
    %v414 = vunpack.c.h.b16 %v72
    %v415 = vunpack.c.l.b16 %v73
    %v416 = vunpack.c.h.b16 %v73
    %v417 = vunpack.c.l.b16 %v74
    %v418 = vunpack.c.h.b16 %v74
    %v419 = vunpack.c.l.b16 %v75
    %v420 = vunpack.c.h.b16 %v75
    %v421 = vunpack.c.l.b16 %v76
    %v422 = vunpack.c.h.b16 %v76
    %v423 = vunpack.c.l.b16 %v77
    %v424 = vunpack.c.h.b16 %v77
    %v425 = vunpack.c.l.b16 %v78
    %v426 = vunpack.c.h.b16 %v78
    %v427 = vunpack.c.l.b16 %v79
    %v428 = vunpack.c.h.b16 %v79
    %v429 = vunpack.c.l.b16 %v80
    %v430 = vunpack.c.h.b16 %v80
    %v431 = vunpack.c.l.b16 %v81
    %v432 = vunpack.c.h.b16 %v81
    %v433 = vunpack.c.l.b16 %v82
    %v434 = vunpack.c.h.b16 %v82
    %v435 = vunpack.c.l.b16 %v83
    %v436 = vunpack.c.h.b16 %v83
    %v437 = vunpack.c.l.b16 %v84
    %v438 = vunpack.c.h.b16 %v84
    %v439 = vunpack.c.l.b16 %v85
    %v440 = vunpack.c.h.b16 %v85
    %v441 = vunpack.c.l.b16 %v86
    %v442 = vunpack.c.h.b16 %v86
    %v443 = vunpack.c.l.b16 %v87
    %v444 = vunpack.c.h.b16 %v87
    %v445 = vunpack.c.l.b16 %v88
    %v446 = vunpack.c.h.b16 %v88
    %v447 = vunpack.c.l.b16 %v89
    %v448 = vunpack.c.h.b16 %v89
    %v449 = vunpack.c.l.b16 %v90
    %v450 = vunpack.c.h.b16 %v90
    %v451 = vunpack.c.l.b16 %v91
    %v452 = vunpack.c.h.b16 %v91
    %v453 = vunpack.c.l.b16 %v92
    %v454 = vunpack.c.h.b16 %v92
    %v455 = vunpack.c.l.b16 %v93
    %v456 = vunpack.c.h.b16 %v93
    %v457 = vunpack.c.l.b16 %v94
    %v458 = vunpack.c.h.b16 %v94
    %v459 = vunpack.c.l.b16 %v95
    %v460 = vunpack.c.h.b16 %v95
    %v461 = vunpack.c.l.b16 %v96
    %v462 = vunpack.c.h.b16 %v96
    %v463 = vunpack.c.l.b16 %v97
    %v464 = vunpack.c.h.b16 %v97
    %v465 = vunpack.c.l.b16 %v98
    %v466 = vunpack.c.h.b16 %v98
    %v467 = vunpack.c.l.b16 %v99
    %v468 = vunpack.c.h.b16 %v99
    %v469 = vunpack.c.l.b16 %v100
    %v470 = vunpack.c.h.b16 %v100
    %v471 = vunpack.c.l.b16 %v101
    %v472 = vunpack.c.h.b16 %v101
    %v473 = vunpack.c.l.b16 %v102
    %v474 = vunpack.c.h.b16 %v102
    %v475 = vunpack.c.l.b16 %v103
    %v476 = vunpack.c.h.b16 %v103
    %v477 = vunpack.c.l.b16 %v104
    %v478 = vunpack.c.h.b16 %v104
    %v479 = vunpack.c.l.b16 %v105
    %v480 = vunpack.c.h.b16 %v105
    %v481 = vunpack.c.l.b16 %v106
    %v482 = vunpack.c.h.b16 %v106
    %v483 = vunpack.c.l.b16 %v107
    %v484 = vunpack.c.h.b16 %v107
    %v485 = vunpack.c.l.b16 %v108
    %v486 = vunpack.c.h.b16 %v108
    %v487 = vunpack.c.l.b16 %v109
    %v488 = vunpack.c.h.b16 %v109
    %v489 = vunpack.c.l.b16 %v110
    %v490 = vunpack.c.h.b16 %v110
    %v491 = vunpack.c.l.b16 %v111
    %v492 = vunpack.c.h.b16 %v111
    %v493 = vunpack.c.l.b16 %v112
    %v494 = vunpack.c.h.b16 %v112
    %v495 = vunpack.c.l.b16 %v113
    %v496 = vunpack.c.h.b16 %v113
    %v497 = vunpack.c.l.b16 %v114
    %v498 = vunpack.c.h.b16 %v114
    %v499 = vunpack.c.l.b16 %v115
    %v500 = vunpack.c.h.b16 %v115
    %v501 = vunpack.c.l.b16 %v116
    %v502 = vunpack.c.h.b16 %v116
    %v503 = vunpack.c.l.b16 %v117
    %v504 = vunpack.c.h.b16 %v117
    %v505 = vunpack.c.l.b16 %v118
    %v506 = vunpack.c.h.b16 %v118
    %v507 = vunpack.c.l.b16 %v119
    %v508 = vunpack.c.h.b16 %v119
    %v509 = vunpack.c.l.b16 %v120
    %v510 = vunpack.c.h.b16 %v120
    %v511 = vunpack.c.l.b16 %v121
    %v512 = vunpack.c.h.b16 %v121
    %v513 = vunpack.c.l.b16 %v122
    %v514 = vunpack.c.h.b16 %v122
    %v515 = vunpack.c.l.b16 %v123
    %v516 = vunpack.c.h.b16 %v123
    %v517 = vunpack.c.l.b16 %v124
    %v518 = vunpack.c.h.b16 %v124
    %v519 = vunpack.c.l.b16 %v125
    %v520 = vunpack.c.h.b16 %v125
    %v521 = vunpack.c.l.b16 %v126
    %v522 = vunpack.c.h.b16 %v126
    %v523 = vunpack.c.l.b16 %v127
    %v524 = vunpack.c.h.b16 %v127
    %v525 = vunpack.c.l.b16 %v128
    %v526 = vunpack.c.h.b16 %v128
    %v527 = vunpack.c.l.b16 %v129
    %v528 = vunpack.c.h.b16 %v129
    %v529 = vunpack.c.l.b16 %v130
    %v530 = vunpack.c.h.b16 %v130
    %v531 = vunpack.c.l.b16 %v131
    %v532 = vunpack.c.h.b16 %v131
    %v533 = vunpack.c.l.b16 %v132
    %v534 = vunpack.c.h.b16 %v132
    %v535 = vunpack.c.l.b16 %v133
    %v536 = vunpack.c.h.b16 %v133
    %v537 = vunpack.c.l.b16 %v134
    %v538 = vunpack.c.h.b16 %v134
    %v539 = vunpack.c.l.b16 %v135
    %v540 = vunpack.c.h.b16 %v135
    %v541 = vunpack.c.l.b16 %v136
    %v542 = vunpack.c.h.b16 %v136
    %v543 = vunpack.c.l.b16 %v137
    %v544 = vunpack.c.h.b16 %v137
    %v545 = vunpack.c.l.b16 %v138
    %v546 = vunpack.c.h.b16 %v138
    %v547 = vunpack.c.l.b16 %v139
    %v548 = vunpack.c.h.b16 %v139
    %v549 = vunpack.c.l.b16 %v140
    %v550 = vunpack.c.h.b16 %v140
    %v551 = vunpack.c.l.b16 %v141
    %v552 = vunpack.c.h.b16 %v141
    %v553 = vunpack.c.l.b16 %v142
    %v554 = vunpack.c.h.b16 %v142
    %v555 = vunpack.c.l.b16 %v143
    %v556 = vunpack.c.h.b16 %v143
    %v557 = vunpack.c.l.b16 %v144
    %v558 = vunpack.c.h.b16 %v144
    %v559 = vunpack.c.l.b16 %v145
    %v560 = vunpack.c.h.b16 %v145
    %v561 = vunpack.c.l.b16 %v146
    %v562 = vunpack.c.h.b16 %v146
    %v563 = vunpack.c.l.b16 %v147
    %v564 = vunpack.c.h.b16 %v147
    %v565 = vunpack.c.l.b16 %v148
    %v566 = vunpack.c.h.b16 %v148
    %v567 = vunpack.c.l.b16 %v149
    %v568 = vunpack.c.h.b16 %v149
    %v569 = vunpack.c.l.b16 %v150
    %v570 = vunpack.c.h.b16 %v150
    %v571 = vunpack.c.l.b16 %v151
    %v572 = vunpack.c.h.b16 %v151
    %v573 = vunpack.c.l.b16 %v152
    %v574 = vunpack.c.h.b16 %v152
    %v575 = vunpack.c.l.b16 %v153
    %v576 = vunpack.c.h.b16 %v153
    %v577 = vunpack.c.l.b16 %v154
    %v578 = vunpack.c.h.b16 %v154
    %v579 = vunpack.c.l.b16 %v155
    %v580 = vunpack.c.h.b16 %v155
    %v581 = vunpack.c.l.b16 %v156
    %v582 = vunpack.c.h.b16 %v156
    %v583 = vunpack.c.l.b16 %v157
    %v584 = vunpack.c.h.b16 %v157
    %v585 = vunpack.c.l.b16 %v158
    %v586 = vunpack.c.h.b16 %v158
    %v587 = vunpack.c.l.b16 %v159
    %v588 = vunpack.c.h.b16 %v159
    %v589 = vunpack.c.l.b16 %v160
    %v590 = vunpack.c.h.b16 %v160
    %v591 = vunpack.c.l.b16 %v161
    %v592 = vunpack.c.h.b16 %v161
    %v593 = vunpack.c.l.b16 %v162
    %v594 = vunpack.c.h.b16 %v162
    %v595 = vunpack.c.l.b16 %v163
    %v596 = vunpack.c.h.b16 %v163
    %v597 = vunpack.c.l.b16 %v164
    %v598 = vunpack.c.h.b16 %v164
    %v599 = vunpack.c.l.b16 %v165
    %v600 = vunpack.c.h.b16 %v165
    %v601 = vunpack.c.l.b16 %v166
    %v602 = vunpack.c.h.b16 %v166
    %v603 = vunpack.c.l.b16 %v167
    %v604 = vunpack.c.h.b16 %v167
    %v605 = vunpack.c.l.b16 %v168
    %v606 = vunpack.c.h.b16 %v168
    %v607 = vunpack.c.l.b16 %v169
    %v608 = vunpack.c.h.b16 %v169
    %v609 = vunpack.c.l.b16 %v170
    %v610 = vunpack.c.h.b16 %v170
    %v611 = vunpack.c.l.b16 %v171
    %v612 = vunpack.c.h.b16 %v171
    %v613 = vunpack.c.l.b16 %v172
    %v614 = vunpack.c.h.b16 %v172
    %v615 = vunpack.c.l.b16 %v173
    %v616 = vunpack.c.h.b16 %v173
    %v617 = vunpack.c.l.b16 %v174
    %v618 = vunpack.c.h.b16 %v174
    %v619 = vunpack.c.l.b16 %v175
    %v620 = vunpack.c.h.b16 %v175
    %v621 = vunpack.c.l.b16 %v176
    %v622 = vunpack.c.h.b16 %v176
    %v623 = vunpack.c.l.b16 %v177
    %v624 = vunpack.c.h.b16 %v177
    %v625 = vunpack.c.l.b16 %v178
    %v626 = vunpack.c.h.b16 %v178
    %v627 = vunpack.c.l.b16 %v179
    %v628 = vunpack.c.h.b16 %v179
    %v629 = vunpack.c.l.b16 %v180
    %v630 = vunpack.c.h.b16 %v180
    %v631 = vunpack.c.l.b16 %v181
    %v632 = vunpack.c.h.b16 %v181
    %v633 = vunpack.c.l.b16 %v182
    %v634 = vunpack.c.h.b16 %v182
    %v635 = vunpack.c.l.b16 %v183
    %v636 = vunpack.c.h.b16 %v183
    %v637 = vunpack.c.l.b16 %v184
    %v638 = vunpack.c.h.b16 %v184
    %v639 = vunpack.c.l.b16 %v185
    %v640 = vunpack.c.h.b16 %v185
    %v641 = vunpack.c.l.b16 %v186
    %v642 = vunpack.c.h.b16 %v186
    %v643 = vunpack.c.l.b16 %v187
    %v644 = vunpack.c.h.b16 %v187
    %v645 = vunpack.c.l.b16 %v188
    %v646 = vunpack.c.h.b16 %v188
    %v647 = vunpack.c.l.b16 %v189
    %v648 = vunpack.c.h.b16 %v189
    %v649 = vunpack.c.l.b16 %v190
    %v650 = vunpack.c.h.b16 %v190
    %v651 = vunpack.c.l.b16 %v191
    %v652 = vunpack.c.h.b16 %v191
    %v653 = vunpack.c.l.b16 %v192
    %v654 = vunpack.c.h.b16 %v192
    %v655 = vunpack.c.l.b16 %v193
    %v656 = vunpack.c.h.b16 %v193
    %v657 = vunpack.c.l.b16 %v194
    %v658 = vunpack.c.h.b16 %v194
    %v659 = vpack.c.b16 %v411, %v403
    %v660 = vpack.c.b16 %v412, %v404
    %v661 = vpack.c.b16 %v413, %v405
    %v662 = vpack.c.b16 %v414, %v406
    %v663 = vpack.c.b16 %v415, %v407
    %v664 = vpack.c.b16 %v416, %v408
    %v665 = vpack.c.b16 %v417, %v409
    %v666 = vpack.c.b16 %v418, %v410
    %v667 = vpack.c.b16 %v427, %v419
    %v668 = vpack.c.b16 %v428, %v420
    %v669 = vpack.c.b16 %v429, %v421
    %v670 = vpack.c.b16 %v430, %v422
    %v671 = vpack.c.b16 %v431, %v423
    %v672 = vpack.c.b16 %v432, %v424
    %v673 = vpack.c.b16 %v433, %v425
    %v674 = vpack.c.b16 %v434, %v426
    %v675 = vpack.c.b16 %v443, %v435
    %v676 = vpack.c.b16 %v444, %v436
    %v677 = vpack.c.b16 %v445, %v437
    %v678 = vpack.c.b16 %v446, %v438
    %v679 = vpack.c.b16 %v447, %v439
    %v680 = vpack.c.b16 %v448, %v440
    %v681 = vpack.c.b16 %v449, %v441
    %v682 = vpack.c.b16 %v450, %v442
    %v683 = vpack.c.b16 %v459, %v451
    %v684 = vpack.c.b16 %v460, %v452
    %v685 = vpack.c.b16 %v461, %v453
    %v686 = vpack.c.b16 %v462, %v454
    %v687 = vpack.c.b16 %v463, %v455
    %v688 = vpack.c.b16 %v464, %v456
    %v689 = vpack.c.b16 %v465, %v457
    %v690 = vpack.c.b16 %v466, %v458
    %v691 = vpack.c.b16 %v475, %v467
    %v692 = vpack.c.b16 %v476, %v468
    %v693 = vpack.c.b16 %v477, %v469
    %v694 = vpack.c.b16 %v478, %v470
    %v695 = vpack.c.b16 %v479, %v471
    %v696 = vpack.c.b16 %v480, %v472
    %v697 = vpack.c.b16 %v481, %v473
    %v698 = vpack.c.b16 %v482, %v474
    %v699 = vpack.c.b16 %v491, %v483
    %v700 = vpack.c.b16 %v492, %v484
    %v701 = vpack.c.b16 %v493, %v485
    %v702 = vpack.c.b16 %v494, %v486
    %v703 = vpack.c.b16 %v495, %v487
    %v704 = vpack.c.b16 %v496, %v488
    %v705 = vpack.c.b16 %v497, %v489
    %v706 = vpack.c.b16 %v498, %v490
    %v707 = vpack.c.b16 %v507, %v499
    %v708 = vpack.c.b16 %v508, %v500
    %v709 = vpack.c.b16 %v509, %v501
    %v710 = vpack.c.b16 %v510, %v502
    %v711 = vpack.c.b16 %v511, %v503
    %v712 = vpack.c.b16 %v512, %v504
    %v713 = vpack.c.b16 %v513, %v505
    %v714 = vpack.c.b16 %v514, %v506
    %v715 = vpack.c.b16 %v523, %v515
    %v716 = vpack.c.b16 %v524, %v516
    %v717 = vpack.c.b16 %v525, %v517
    %v718 = vpack.c.b16 %v526, %v518
    %v719 = vpack.c.b16 %v527, %v519
    %v720 = vpack.c.b16 %v528, %v520
    %v721 = vpack.c.b16 %v529, %v521
    %v722 = vpack.c.b16 %v530, %v522
    %v723 = vpack.c.b16 %v539, %v531
    %v724 = vpack.c.b16 %v540, %v532
    %v725 = vpack.c.b16 %v541, %v533
    %v726 = vpack.c.b16 %v542, %v534
    %v727 = vpack.c.b16 %v543, %v535
    %v728 = vpack.c.b16 %v544, %v536
    %v729 = vpack.c.b16 %v545, %v537
    %v730 = vpack.c.b16 %v546, %v538
    %v731 = vpack.c.b16 %v555, %v547
    %v732 = vpack.c.b16 %v556, %v548
    %v733 = vpack.c.b16 %v557, %v549
    %v734 = vpack.c.b16 %v558, %v550
    %v735 = vpack.c.b16 %v559, %v551
    %v736 = vpack.c.b16 %v560, %v552
    %v737 = vpack.c.b16 %v561, %v553
    %v738 = vpack.c.b16 %v562, %v554
    %v739 = vpack.c.b16 %v571, %v563
    %v740 = vpack.c.b16 %v572, %v564
    %v741 = vpack.c.b16 %v573, %v565
    %v742 = vpack.c.b16 %v574, %v566
    %v743 = vpack.c.b16 %v575, %v567
    %v744 = vpack.c.b16 %v576, %v568
    %v745 = vpack.c.b16 %v577, %v569
    %v746 = vpack.c.b16 %v578, %v570
    %v747 = vpack.c.b16 %v587, %v579
    %v748 = vpack.c.b16 %v588, %v580
    %v749 = vpack.c.b16 %v589, %v581
    %v750 = vpack.c.b16 %v590, %v582
    %v751 = vpack.c.b16 %v591, %v583
    %v752 = vpack.c.b16 %v592, %v584
    %v753 = vpack.c.b16 %v593, %v585
    %v754 = vpack.c.b16 %v594, %v586
    %v755 = vpack.c.b16 %v603, %v595
    %v756 = vpack.c.b16 %v604, %v596
    %v757 = vpack.c.b16 %v605, %v597
    %v758 = vpack.c.b16 %v606, %v598
    %v759 = vpack.c.b16 %v607, %v599
    %v760 = vpack.c.b16 %v608, %v600
    %v761 = vpack.c.b16 %v609, %v601
    %v762 = vpack.c.b16 %v610, %v602
    %v763 = vpack.c.b16 %v619, %v611
    %v764 = vpack.c.b16 %v620, %v612
    %v765 = vpack.c.b16 %v621, %v613
    %v766 = vpack.c.b16 %v622, %v614
    %v767 = vpack.c.b16 %v623, %v615
    %v768 = vpack.c.b16 %v624, %v616
    %v769 = vpack.c.b16 %v625, %v617
    %v770 = vpack.c.b16 %v626, %v618
    %v771 = vpack.c.b16 %v635, %v627
    %v772 = vpack.c.b16 %v636, %v628
    %v773 = vpack.c.b16 %v637, %v629
    %v774 = vpack.c.b16 %v638, %v630
    %v775 = vpack.c.b16 %v639, %v631
    %v776 = vpack.c.b16 %v640, %v632
    %v777 = vpack.c.b16 %v641, %v633
    %v778 = vpack.c.b16 %v642, %v634
    %v779 = vpack.c.b16 %v651, %v643
    %v780 = vpack.c.b16 %v652, %v644
    %v781 = vpack.c.b16 %v653, %v645
    %v782 = vpack.c.b16 %v654, %v646
    %v783 = vpack.c.b16 %v655, %v647
    %v784 = vpack.c.b16 %v656, %v648
    %v785 = vpack.c.b16 %v657, %v649
    %v786 = vpack.c.b16 %v658, %v650
    %915 = vmatpush.bf16.msra.mxu0 %v715
    %916 = vmatpush.bf16.msra.mxu0 %v707
    %917 = vmatpush.bf16.msra.mxu0 %v699
    %918 = vmatpush.bf16.msra.mxu0 %v691
    %919 = vmatpush.bf16.msra.mxu0 %v683
    %920 = vmatpush.bf16.msra.mxu0 %v675
    %921 = vmatpush.bf16.msra.mxu0 %v667
    %922 = vmatpush.bf16.msra.mxu0 %v659
    %923 = vmatmul.bf16.gmra.mxu0 %v243
    %v924 = vpop.f32.mrf.mxu0
    %v925 = vadd.f32 0.0, %v924
    %v926 = vpop.f32.mrf.mxu0
    %v927 = vadd.f32 0.0, %v926
    %928 = vmatmul.bf16.gmra.mxu0 %v245
    %v929 = vpop.f32.mrf.mxu0
    %v930 = vadd.f32 0.0, %v929
    %v931 = vpop.f32.mrf.mxu0
    %v932 = vadd.f32 0.0, %v931
    %933 = vmatmul.bf16.gmra.mxu0 %v247
    %v934 = vpop.f32.mrf.mxu0
    %v935 = vadd.f32 0.0, %v934
    %v936 = vpop.f32.mrf.mxu0
    %v937 = vadd.f32 0.0, %v936
    %938 = vmatmul.bf16.gmra.mxu0 %v249
    %v939 = vpop.f32.mrf.mxu0
    %v940 = vadd.f32 0.0, %v939
    %v941 = vpop.f32.mrf.mxu0
    %v942 = vadd.f32 0.0, %v941
    %943 = vmatmul.bf16.gmra.mxu0 %v251
    %v944 = vpop.f32.mrf.mxu0
    %v945 = vadd.f32 0.0, %v944
    %v946 = vpop.f32.mrf.mxu0
    %v947 = vadd.f32 0.0, %v946
    %948 = vmatmul.bf16.gmra.mxu0 %v253
    %v949 = vpop.f32.mrf.mxu0
    %v950 = vadd.f32 0.0, %v949
    %v951 = vpop.f32.mrf.mxu0
    %v952 = vadd.f32 0.0, %v951
    %953 = vmatmul.bf16.gmra.mxu0 %v255
    %v954 = vpop.f32.mrf.mxu0
    %v955 = vadd.f32 0.0, %v954
    %v956 = vpop.f32.mrf.mxu0
    %v957 = vadd.f32 0.0, %v956
    %958 = vmatmul.bf16.gmra.mxu0 %v257
    %v959 = vpop.f32.mrf.mxu0
    %v960 = vadd.f32 0.0, %v959
    %v961 = vpop.f32.mrf.mxu0
    %v962 = vadd.f32 0.0, %v961
    %963 = vdwg.mxu0
    %964 = vmatpush.bf16.msra.mxu0 %v779
    %965 = vmatpush.bf16.msra.mxu0 %v771
    %966 = vmatpush.bf16.msra.mxu0 %v763
    %967 = vmatpush.bf16.msra.mxu0 %v755
    %968 = vmatpush.bf16.msra.mxu0 %v747
    %969 = vmatpush.bf16.msra.mxu0 %v739
    %970 = vmatpush.bf16.msra.mxu0 %v731
    %971 = vmatpush.bf16.msra.mxu0 %v723
    %972 = vmatmul.bf16.gmra.mxu0 %v244
    %v973 = vpop.f32.mrf.mxu0
    %v974 = vadd.f32 %v925, %v973
    %v975 = vpop.f32.mrf.mxu0
    %v976 = vadd.f32 %v927, %v975
    %977 = vmatmul.bf16.gmra.mxu0 %v246
    %v978 = vpop.f32.mrf.mxu0
    %v979 = vadd.f32 %v930, %v978
    %v980 = vpop.f32.mrf.mxu0
    %v981 = vadd.f32 %v932, %v980
    %982 = vmatmul.bf16.gmra.mxu0 %v248
    %v983 = vpop.f32.mrf.mxu0
    %v984 = vadd.f32 %v935, %v983
    %v985 = vpop.f32.mrf.mxu0
    %v986 = vadd.f32 %v937, %v985
    %987 = vmatmul.bf16.gmra.mxu0 %v250
    %v988 = vpop.f32.mrf.mxu0
    %v989 = vadd.f32 %v940, %v988
    %v990 = vpop.f32.mrf.mxu0
    %v991 = vadd.f32 %v942, %v990
    %992 = vmatmul.bf16.gmra.mxu0 %v252
    %v993 = vpop.f32.mrf.mxu0
    %v994 = vadd.f32 %v945, %v993
    %v995 = vpop.f32.mrf.mxu0
    %v996 = vadd.f32 %v947, %v995
    %997 = vmatmul.bf16.gmra.mxu0 %v254
    %v998 = vpop.f32.mrf.mxu0
    %v999 = vadd.f32 %v950, %v998
    %v1000 = vpop.f32.mrf.mxu0
    %v1001 = vadd.f32 %v952, %v1000
    %1002 = vmatmul.bf16.gmra.mxu0 %v256
    %v1003 = vpop.f32.mrf.mxu0
    %v1004 = vadd.f32 %v955, %v1003
    %v1005 = vpop.f32.mrf.mxu0
    %v1006 = vadd.f32 %v957, %v1005
    %1007 = vmatmul.bf16.gmra.mxu0 %v258
    %v1008 = vpop.f32.mrf.mxu0
    %v1009 = vadd.f32 %v960, %v1008
    %v1010 = vpop.f32.mrf.mxu0
    %v1011 = vadd.f32 %v962, %v1010
    %1012 = vdwg.mxu0
    %1013 = vmatpush.bf16.msra.mxu0 %v716
    %1014 = vmatpush.bf16.msra.mxu0 %v708
    %1015 = vmatpush.bf16.msra.mxu0 %v700
    %1016 = vmatpush.bf16.msra.mxu0 %v692
    %1017 = vmatpush.bf16.msra.mxu0 %v684
    %1018 = vmatpush.bf16.msra.mxu0 %v676
    %1019 = vmatpush.bf16.msra.mxu0 %v668
    %1020 = vmatpush.bf16.msra.mxu0 %v660
    %1021 = vmatmul.bf16.gmra.mxu0 %v243
    %v1022 = vpop.f32.mrf.mxu0
    %v1023 = vadd.f32 0.0, %v1022
    %v1024 = vpop.f32.mrf.mxu0
    %v1025 = vadd.f32 0.0, %v1024
    %1026 = vmatmul.bf16.gmra.mxu0 %v245
    %v1027 = vpop.f32.mrf.mxu0
    %v1028 = vadd.f32 0.0, %v1027
    %v1029 = vpop.f32.mrf.mxu0
    %v1030 = vadd.f32 0.0, %v1029
    %1031 = vmatmul.bf16.gmra.mxu0 %v247
    %v1032 = vpop.f32.mrf.mxu0
    %v1033 = vadd.f32 0.0, %v1032
    %v1034 = vpop.f32.mrf.mxu0
    %v1035 = vadd.f32 0.0, %v1034
    %1036 = vmatmul.bf16.gmra.mxu0 %v249
    %v1037 = vpop.f32.mrf.mxu0
    %v1038 = vadd.f32 0.0, %v1037
    %v1039 = vpop.f32.mrf.mxu0
    %v1040 = vadd.f32 0.0, %v1039
    %1041 = vmatmul.bf16.gmra.mxu0 %v251
    %v1042 = vpop.f32.mrf.mxu0
    %v1043 = vadd.f32 0.0, %v1042
    %v1044 = vpop.f32.mrf.mxu0
    %v1045 = vadd.f32 0.0, %v1044
    %1046 = vmatmul.bf16.gmra.mxu0 %v253
    %v1047 = vpop.f32.mrf.mxu0
    %v1048 = vadd.f32 0.0, %v1047
    %v1049 = vpop.f32.mrf.mxu0
    %v1050 = vadd.f32 0.0, %v1049
    %1051 = vmatmul.bf16.gmra.mxu0 %v255
    %v1052 = vpop.f32.mrf.mxu0
    %v1053 = vadd.f32 0.0, %v1052
    %v1054 = vpop.f32.mrf.mxu0
    %v1055 = vadd.f32 0.0, %v1054
    %1056 = vmatmul.bf16.gmra.mxu0 %v257
    %v1057 = vpop.f32.mrf.mxu0
    %v1058 = vadd.f32 0.0, %v1057
    %v1059 = vpop.f32.mrf.mxu0
    %v1060 = vadd.f32 0.0, %v1059
    %1061 = vdwg.mxu0
    %1062 = vmatpush.bf16.msra.mxu0 %v780
    %1063 = vmatpush.bf16.msra.mxu0 %v772
    %1064 = vmatpush.bf16.msra.mxu0 %v764
    %1065 = vmatpush.bf16.msra.mxu0 %v756
    %1066 = vmatpush.bf16.msra.mxu0 %v748
    %1067 = vmatpush.bf16.msra.mxu0 %v740
    %1068 = vmatpush.bf16.msra.mxu0 %v732
    %1069 = vmatpush.bf16.msra.mxu0 %v724
    %1070 = vmatmul.bf16.gmra.mxu0 %v244
    %v1071 = vpop.f32.mrf.mxu0
    %v1072 = vadd.f32 %v1023, %v1071
    %v1073 = vpop.f32.mrf.mxu0
    %v1074 = vadd.f32 %v1025, %v1073
    %1075 = vmatmul.bf16.gmra.mxu0 %v246
    %v1076 = vpop.f32.mrf.mxu0
    %v1077 = vadd.f32 %v1028, %v1076
    %v1078 = vpop.f32.mrf.mxu0
    %v1079 = vadd.f32 %v1030, %v1078
    %1080 = vmatmul.bf16.gmra.mxu0 %v248
    %v1081 = vpop.f32.mrf.mxu0
    %v1082 = vadd.f32 %v1033, %v1081
    %v1083 = vpop.f32.mrf.mxu0
    %v1084 = vadd.f32 %v1035, %v1083
    %1085 = vmatmul.bf16.gmra.mxu0 %v250
    %v1086 = vpop.f32.mrf.mxu0
    %v1087 = vadd.f32 %v1038, %v1086
    %v1088 = vpop.f32.mrf.mxu0
    %v1089 = vadd.f32 %v1040, %v1088
    %1090 = vmatmul.bf16.gmra.mxu0 %v252
    %v1091 = vpop.f32.mrf.mxu0
    %v1092 = vadd.f32 %v1043, %v1091
    %v1093 = vpop.f32.mrf.mxu0
    %v1094 = vadd.f32 %v1045, %v1093
    %1095 = vmatmul.bf16.gmra.mxu0 %v254
    %v1096 = vpop.f32.mrf.mxu0
    %v1097 = vadd.f32 %v1048, %v1096
    %v1098 = vpop.f32.mrf.mxu0
    %v1099 = vadd.f32 %v1050, %v1098
    %1100 = vmatmul.bf16.gmra.mxu0 %v256
    %v1101 = vpop.f32.mrf.mxu0
    %v1102 = vadd.f32 %v1053, %v1101
    %v1103 = vpop.f32.mrf.mxu0
    %v1104 = vadd.f32 %v1055, %v1103
    %1105 = vmatmul.bf16.gmra.mxu0 %v258
    %v1106 = vpop.f32.mrf.mxu0
    %v1107 = vadd.f32 %v1058, %v1106
    %v1108 = vpop.f32.mrf.mxu0
    %v1109 = vadd.f32 %v1060, %v1108
    %1110 = vdwg.mxu0
    %1111 = vmatpush.bf16.msra.mxu0 %v717
    %1112 = vmatpush.bf16.msra.mxu0 %v709
    %1113 = vmatpush.bf16.msra.mxu0 %v701
    %1114 = vmatpush.bf16.msra.mxu0 %v693
    %1115 = vmatpush.bf16.msra.mxu0 %v685
    %1116 = vmatpush.bf16.msra.mxu0 %v677
    %1117 = vmatpush.bf16.msra.mxu0 %v669
    %1118 = vmatpush.bf16.msra.mxu0 %v661
    %1119 = vmatmul.bf16.gmra.mxu0 %v243
    %v1120 = vpop.f32.mrf.mxu0
    %v1121 = vadd.f32 0.0, %v1120
    %v1122 = vpop.f32.mrf.mxu0
    %v1123 = vadd.f32 0.0, %v1122
    %1124 = vmatmul.bf16.gmra.mxu0 %v245
    %v1125 = vpop.f32.mrf.mxu0
    %v1126 = vadd.f32 0.0, %v1125
    %v1127 = vpop.f32.mrf.mxu0
    %v1128 = vadd.f32 0.0, %v1127
    %1129 = vmatmul.bf16.gmra.mxu0 %v247
    %v1130 = vpop.f32.mrf.mxu0
    %v1131 = vadd.f32 0.0, %v1130
    %v1132 = vpop.f32.mrf.mxu0
    %v1133 = vadd.f32 0.0, %v1132
    %1134 = vmatmul.bf16.gmra.mxu0 %v249
    %v1135 = vpop.f32.mrf.mxu0
    %v1136 = vadd.f32 0.0, %v1135
    %v1137 = vpop.f32.mrf.mxu0
    %v1138 = vadd.f32 0.0, %v1137
    %1139 = vmatmul.bf16.gmra.mxu0 %v251
    %v1140 = vpop.f32.mrf.mxu0
    %v1141 = vadd.f32 0.0, %v1140
    %v1142 = vpop.f32.mrf.mxu0
    %v1143 = vadd.f32 0.0, %v1142
    %1144 = vmatmul.bf16.gmra.mxu0 %v253
    %v1145 = vpop.f32.mrf.mxu0
    %v1146 = vadd.f32 0.0, %v1145
    %v1147 = vpop.f32.mrf.mxu0
    %v1148 = vadd.f32 0.0, %v1147
    %1149 = vmatmul.bf16.gmra.mxu0 %v255
    %v1150 = vpop.f32.mrf.mxu0
    %v1151 = vadd.f32 0.0, %v1150
    %v1152 = vpop.f32.mrf.mxu0
    %v1153 = vadd.f32 0.0, %v1152
    %1154 = vmatmul.bf16.gmra.mxu0 %v257
    %v1155 = vpop.f32.mrf.mxu0
    %v1156 = vadd.f32 0.0, %v1155
    %v1157 = vpop.f32.mrf.mxu0
    %v1158 = vadd.f32 0.0, %v1157
    %1159 = vdwg.mxu0
    %1160 = vmatpush.bf16.msra.mxu0 %v781
    %1161 = vmatpush.bf16.msra.mxu0 %v773
    %1162 = vmatpush.bf16.msra.mxu0 %v765
    %1163 = vmatpush.bf16.msra.mxu0 %v757
    %1164 = vmatpush.bf16.msra.mxu0 %v749
    %1165 = vmatpush.bf16.msra.mxu0 %v741
    %1166 = vmatpush.bf16.msra.mxu0 %v733
    %1167 = vmatpush.bf16.msra.mxu0 %v725
    %1168 = vmatmul.bf16.gmra.mxu0 %v244
    %v1169 = vpop.f32.mrf.mxu0
    %v1170 = vadd.f32 %v1121, %v1169
    %v1171 = vpop.f32.mrf.mxu0
    %v1172 = vadd.f32 %v1123, %v1171
    %1173 = vmatmul.bf16.gmra.mxu0 %v246
    %v1174 = vpop.f32.mrf.mxu0
    %v1175 = vadd.f32 %v1126, %v1174
    %v1176 = vpop.f32.mrf.mxu0
    %v1177 = vadd.f32 %v1128, %v1176
    %1178 = vmatmul.bf16.gmra.mxu0 %v248
    %v1179 = vpop.f32.mrf.mxu0
    %v1180 = vadd.f32 %v1131, %v1179
    %v1181 = vpop.f32.mrf.mxu0
    %v1182 = vadd.f32 %v1133, %v1181
    %1183 = vmatmul.bf16.gmra.mxu0 %v250
    %v1184 = vpop.f32.mrf.mxu0
    %v1185 = vadd.f32 %v1136, %v1184
    %v1186 = vpop.f32.mrf.mxu0
    %v1187 = vadd.f32 %v1138, %v1186
    %1188 = vmatmul.bf16.gmra.mxu0 %v252
    %v1189 = vpop.f32.mrf.mxu0
    %v1190 = vadd.f32 %v1141, %v1189
    %v1191 = vpop.f32.mrf.mxu0
    %v1192 = vadd.f32 %v1143, %v1191
    %1193 = vmatmul.bf16.gmra.mxu0 %v254
    %v1194 = vpop.f32.mrf.mxu0
    %v1195 = vadd.f32 %v1146, %v1194
    %v1196 = vpop.f32.mrf.mxu0
    %v1197 = vadd.f32 %v1148, %v1196
    %1198 = vmatmul.bf16.gmra.mxu0 %v256
    %v1199 = vpop.f32.mrf.mxu0
    %v1200 = vadd.f32 %v1151, %v1199
    %v1201 = vpop.f32.mrf.mxu0
    %v1202 = vadd.f32 %v1153, %v1201
    %1203 = vmatmul.bf16.gmra.mxu0 %v258
    %v1204 = vpop.f32.mrf.mxu0
    %v1205 = vadd.f32 %v1156, %v1204
    %v1206 = vpop.f32.mrf.mxu0
    %v1207 = vadd.f32 %v1158, %v1206
    %1208 = vdwg.mxu0
    %1209 = vmatpush.bf16.msra.mxu0 %v718
    %1210 = vmatpush.bf16.msra.mxu0 %v710
    %1211 = vmatpush.bf16.msra.mxu0 %v702
    %1212 = vmatpush.bf16.msra.mxu0 %v694
    %1213 = vmatpush.bf16.msra.mxu0 %v686
    %1214 = vmatpush.bf16.msra.mxu0 %v678
    %1215 = vmatpush.bf16.msra.mxu0 %v670
    %1216 = vmatpush.bf16.msra.mxu0 %v662
    %1217 = vmatmul.bf16.gmra.mxu0 %v243
    %v1218 = vpop.f32.mrf.mxu0
    %v1219 = vadd.f32 0.0, %v1218
    %v1220 = vpop.f32.mrf.mxu0
    %v1221 = vadd.f32 0.0, %v1220
    %1222 = vmatmul.bf16.gmra.mxu0 %v245
    %v1223 = vpop.f32.mrf.mxu0
    %v1224 = vadd.f32 0.0, %v1223
    %v1225 = vpop.f32.mrf.mxu0
    %v1226 = vadd.f32 0.0, %v1225
    %1227 = vmatmul.bf16.gmra.mxu0 %v247
    %v1228 = vpop.f32.mrf.mxu0
    %v1229 = vadd.f32 0.0, %v1228
    %v1230 = vpop.f32.mrf.mxu0
    %v1231 = vadd.f32 0.0, %v1230
    %1232 = vmatmul.bf16.gmra.mxu0 %v249
    %v1233 = vpop.f32.mrf.mxu0
    %v1234 = vadd.f32 0.0, %v1233
    %v1235 = vpop.f32.mrf.mxu0
    %v1236 = vadd.f32 0.0, %v1235
    %1237 = vmatmul.bf16.gmra.mxu0 %v251
    %v1238 = vpop.f32.mrf.mxu0
    %v1239 = vadd.f32 0.0, %v1238
    %v1240 = vpop.f32.mrf.mxu0
    %v1241 = vadd.f32 0.0, %v1240
    %1242 = vmatmul.bf16.gmra.mxu0 %v253
    %v1243 = vpop.f32.mrf.mxu0
    %v1244 = vadd.f32 0.0, %v1243
    %v1245 = vpop.f32.mrf.mxu0
    %v1246 = vadd.f32 0.0, %v1245
    %1247 = vmatmul.bf16.gmra.mxu0 %v255
    %v1248 = vpop.f32.mrf.mxu0
    %v1249 = vadd.f32 0.0, %v1248
    %v1250 = vpop.f32.mrf.mxu0
    %v1251 = vadd.f32 0.0, %v1250
    %1252 = vmatmul.bf16.gmra.mxu0 %v257
    %v1253 = vpop.f32.mrf.mxu0
    %v1254 = vadd.f32 0.0, %v1253
    %v1255 = vpop.f32.mrf.mxu0
    %v1256 = vadd.f32 0.0, %v1255
    %1257 = vdwg.mxu0
    %1258 = vmatpush.bf16.msra.mxu0 %v782
    %1259 = vmatpush.bf16.msra.mxu0 %v774
    %1260 = vmatpush.bf16.msra.mxu0 %v766
    %1261 = vmatpush.bf16.msra.mxu0 %v758
    %1262 = vmatpush.bf16.msra.mxu0 %v750
    %1263 = vmatpush.bf16.msra.mxu0 %v742
    %1264 = vmatpush.bf16.msra.mxu0 %v734
    %1265 = vmatpush.bf16.msra.mxu0 %v726
    %1266 = vmatmul.bf16.gmra.mxu0 %v244
    %v1267 = vpop.f32.mrf.mxu0
    %v1268 = vadd.f32 %v1219, %v1267
    %v1269 = vpop.f32.mrf.mxu0
    %v1270 = vadd.f32 %v1221, %v1269
    %1271 = vmatmul.bf16.gmra.mxu0 %v246
    %v1272 = vpop.f32.mrf.mxu0
    %v1273 = vadd.f32 %v1224, %v1272
    %v1274 = vpop.f32.mrf.mxu0
    %v1275 = vadd.f32 %v1226, %v1274
    %1276 = vmatmul.bf16.gmra.mxu0 %v248
    %v1277 = vpop.f32.mrf.mxu0
    %v1278 = vadd.f32 %v1229, %v1277
    %v1279 = vpop.f32.mrf.mxu0
    %v1280 = vadd.f32 %v1231, %v1279
    %1281 = vmatmul.bf16.gmra.mxu0 %v250
    %v1282 = vpop.f32.mrf.mxu0
    %v1283 = vadd.f32 %v1234, %v1282
    %v1284 = vpop.f32.mrf.mxu0
    %v1285 = vadd.f32 %v1236, %v1284
    %1286 = vmatmul.bf16.gmra.mxu0 %v252
    %v1287 = vpop.f32.mrf.mxu0
    %v1288 = vadd.f32 %v1239, %v1287
    %v1289 = vpop.f32.mrf.mxu0
    %v1290 = vadd.f32 %v1241, %v1289
    %1291 = vmatmul.bf16.gmra.mxu0 %v254
    %v1292 = vpop.f32.mrf.mxu0
    %v1293 = vadd.f32 %v1244, %v1292
    %v1294 = vpop.f32.mrf.mxu0
    %v1295 = vadd.f32 %v1246, %v1294
    %1296 = vmatmul.bf16.gmra.mxu0 %v256
    %v1297 = vpop.f32.mrf.mxu0
    %v1298 = vadd.f32 %v1249, %v1297
    %v1299 = vpop.f32.mrf.mxu0
    %v1300 = vadd.f32 %v1251, %v1299
    %1301 = vmatmul.bf16.gmra.mxu0 %v258
    %v1302 = vpop.f32.mrf.mxu0
    %v1303 = vadd.f32 %v1254, %v1302
    %v1304 = vpop.f32.mrf.mxu0
    %v1305 = vadd.f32 %v1256, %v1304
    %1306 = vdwg.mxu0
    %1307 = vmatpush.bf16.msra.mxu0 %v719
    %1308 = vmatpush.bf16.msra.mxu0 %v711
    %1309 = vmatpush.bf16.msra.mxu0 %v703
    %1310 = vmatpush.bf16.msra.mxu0 %v695
    %1311 = vmatpush.bf16.msra.mxu0 %v687
    %1312 = vmatpush.bf16.msra.mxu0 %v679
    %1313 = vmatpush.bf16.msra.mxu0 %v671
    %1314 = vmatpush.bf16.msra.mxu0 %v663
    %1315 = vmatmul.bf16.gmra.mxu0 %v243
    %v1316 = vpop.f32.mrf.mxu0
    %v1317 = vadd.f32 0.0, %v1316
    %v1318 = vpop.f32.mrf.mxu0
    %v1319 = vadd.f32 0.0, %v1318
    %1320 = vmatmul.bf16.gmra.mxu0 %v245
    %v1321 = vpop.f32.mrf.mxu0
    %v1322 = vadd.f32 0.0, %v1321
    %v1323 = vpop.f32.mrf.mxu0
    %v1324 = vadd.f32 0.0, %v1323
    %1325 = vmatmul.bf16.gmra.mxu0 %v247
    %v1326 = vpop.f32.mrf.mxu0
    %v1327 = vadd.f32 0.0, %v1326
    %v1328 = vpop.f32.mrf.mxu0
    %v1329 = vadd.f32 0.0, %v1328
    %1330 = vmatmul.bf16.gmra.mxu0 %v249
    %v1331 = vpop.f32.mrf.mxu0
    %v1332 = vadd.f32 0.0, %v1331
    %v1333 = vpop.f32.mrf.mxu0
    %v1334 = vadd.f32 0.0, %v1333
    %1335 = vmatmul.bf16.gmra.mxu0 %v251
    %v1336 = vpop.f32.mrf.mxu0
    %v1337 = vadd.f32 0.0, %v1336
    %v1338 = vpop.f32.mrf.mxu0
    %v1339 = vadd.f32 0.0, %v1338
    %1340 = vmatmul.bf16.gmra.mxu0 %v253
    %v1341 = vpop.f32.mrf.mxu0
    %v1342 = vadd.f32 0.0, %v1341
    %v1343 = vpop.f32.mrf.mxu0
    %v1344 = vadd.f32 0.0, %v1343
    %1345 = vmatmul.bf16.gmra.mxu0 %v255
    %v1346 = vpop.f32.mrf.mxu0
    %v1347 = vadd.f32 0.0, %v1346
    %v1348 = vpop.f32.mrf.mxu0
    %v1349 = vadd.f32 0.0, %v1348
    %1350 = vmatmul.bf16.gmra.mxu0 %v257
    %v1351 = vpop.f32.mrf.mxu0
    %v1352 = vadd.f32 0.0, %v1351
    %v1353 = vpop.f32.mrf.mxu0
    %v1354 = vadd.f32 0.0, %v1353
    %1355 = vdwg.mxu0
    %1356 = vmatpush.bf16.msra.mxu0 %v783
    %1357 = vmatpush.bf16.msra.mxu0 %v775
    %1358 = vmatpush.bf16.msra.mxu0 %v767
    %1359 = vmatpush.bf16.msra.mxu0 %v759
    %1360 = vmatpush.bf16.msra.mxu0 %v751
    %1361 = vmatpush.bf16.msra.mxu0 %v743
    %1362 = vmatpush.bf16.msra.mxu0 %v735
    %1363 = vmatpush.bf16.msra.mxu0 %v727
    %1364 = vmatmul.bf16.gmra.mxu0 %v244
    %v1365 = vpop.f32.mrf.mxu0
    %v1366 = vadd.f32 %v1317, %v1365
    %v1367 = vpop.f32.mrf.mxu0
    %v1368 = vadd.f32 %v1319, %v1367
    %1369 = vmatmul.bf16.gmra.mxu0 %v246
    %v1370 = vpop.f32.mrf.mxu0
    %v1371 = vadd.f32 %v1322, %v1370
    %v1372 = vpop.f32.mrf.mxu0
    %v1373 = vadd.f32 %v1324, %v1372
    %1374 = vmatmul.bf16.gmra.mxu0 %v248
    %v1375 = vpop.f32.mrf.mxu0
    %v1376 = vadd.f32 %v1327, %v1375
    %v1377 = vpop.f32.mrf.mxu0
    %v1378 = vadd.f32 %v1329, %v1377
    %1379 = vmatmul.bf16.gmra.mxu0 %v250
    %v1380 = vpop.f32.mrf.mxu0
    %v1381 = vadd.f32 %v1332, %v1380
    %v1382 = vpop.f32.mrf.mxu0
    %v1383 = vadd.f32 %v1334, %v1382
    %1384 = vmatmul.bf16.gmra.mxu0 %v252
    %v1385 = vpop.f32.mrf.mxu0
    %v1386 = vadd.f32 %v1337, %v1385
    %v1387 = vpop.f32.mrf.mxu0
    %v1388 = vadd.f32 %v1339, %v1387
    %1389 = vmatmul.bf16.gmra.mxu0 %v254
    %v1390 = vpop.f32.mrf.mxu0
    %v1391 = vadd.f32 %v1342, %v1390
    %v1392 = vpop.f32.mrf.mxu0
    %v1393 = vadd.f32 %v1344, %v1392
    %1394 = vmatmul.bf16.gmra.mxu0 %v256
    %v1395 = vpop.f32.mrf.mxu0
    %v1396 = vadd.f32 %v1347, %v1395
    %v1397 = vpop.f32.mrf.mxu0
    %v1398 = vadd.f32 %v1349, %v1397
    %1399 = vmatmul.bf16.gmra.mxu0 %v258
    %v1400 = vpop.f32.mrf.mxu0
    %v1401 = vadd.f32 %v1352, %v1400
    %v1402 = vpop.f32.mrf.mxu0
    %v1403 = vadd.f32 %v1354, %v1402
    %1404 = vdwg.mxu0
    %1405 = vmatpush.bf16.msra.mxu0 %v720
    %1406 = vmatpush.bf16.msra.mxu0 %v712
    %1407 = vmatpush.bf16.msra.mxu0 %v704
    %1408 = vmatpush.bf16.msra.mxu0 %v696
    %1409 = vmatpush.bf16.msra.mxu0 %v688
    %1410 = vmatpush.bf16.msra.mxu0 %v680
    %1411 = vmatpush.bf16.msra.mxu0 %v672
    %1412 = vmatpush.bf16.msra.mxu0 %v664
    %1413 = vmatmul.bf16.gmra.mxu0 %v243
    %v1414 = vpop.f32.mrf.mxu0
    %v1415 = vadd.f32 0.0, %v1414
    %v1416 = vpop.f32.mrf.mxu0
    %v1417 = vadd.f32 0.0, %v1416
    %1418 = vmatmul.bf16.gmra.mxu0 %v245
    %v1419 = vpop.f32.mrf.mxu0
    %v1420 = vadd.f32 0.0, %v1419
    %v1421 = vpop.f32.mrf.mxu0
    %v1422 = vadd.f32 0.0, %v1421
    %1423 = vmatmul.bf16.gmra.mxu0 %v247
    %v1424 = vpop.f32.mrf.mxu0
    %v1425 = vadd.f32 0.0, %v1424
    %v1426 = vpop.f32.mrf.mxu0
    %v1427 = vadd.f32 0.0, %v1426
    %1428 = vmatmul.bf16.gmra.mxu0 %v249
    %v1429 = vpop.f32.mrf.mxu0
    %v1430 = vadd.f32 0.0, %v1429
    %v1431 = vpop.f32.mrf.mxu0
    %v1432 = vadd.f32 0.0, %v1431
    %1433 = vmatmul.bf16.gmra.mxu0 %v251
    %v1434 = vpop.f32.mrf.mxu0
    %v1435 = vadd.f32 0.0, %v1434
    %v1436 = vpop.f32.mrf.mxu0
    %v1437 = vadd.f32 0.0, %v1436
    %1438 = vmatmul.bf16.gmra.mxu0 %v253
    %v1439 = vpop.f32.mrf.mxu0
    %v1440 = vadd.f32 0.0, %v1439
    %v1441 = vpop.f32.mrf.mxu0
    %v1442 = vadd.f32 0.0, %v1441
    %1443 = vmatmul.bf16.gmra.mxu0 %v255
    %v1444 = vpop.f32.mrf.mxu0
    %v1445 = vadd.f32 0.0, %v1444
    %v1446 = vpop.f32.mrf.mxu0
    %v1447 = vadd.f32 0.0, %v1446
    %1448 = vmatmul.bf16.gmra.mxu0 %v257
    %v1449 = vpop.f32.mrf.mxu0
    %v1450 = vadd.f32 0.0, %v1449
    %v1451 = vpop.f32.mrf.mxu0
    %v1452 = vadd.f32 0.0, %v1451
    %1453 = vdwg.mxu0
    %1454 = vmatpush.bf16.msra.mxu0 %v784
    %1455 = vmatpush.bf16.msra.mxu0 %v776
    %1456 = vmatpush.bf16.msra.mxu0 %v768
    %1457 = vmatpush.bf16.msra.mxu0 %v760
    %1458 = vmatpush.bf16.msra.mxu0 %v752
    %1459 = vmatpush.bf16.msra.mxu0 %v744
    %1460 = vmatpush.bf16.msra.mxu0 %v736
    %1461 = vmatpush.bf16.msra.mxu0 %v728
    %1462 = vmatmul.bf16.gmra.mxu0 %v244
    %v1463 = vpop.f32.mrf.mxu0
    %v1464 = vadd.f32 %v1415, %v1463
    %v1465 = vpop.f32.mrf.mxu0
    %v1466 = vadd.f32 %v1417, %v1465
    %1467 = vmatmul.bf16.gmra.mxu0 %v246
    %v1468 = vpop.f32.mrf.mxu0
    %v1469 = vadd.f32 %v1420, %v1468
    %v1470 = vpop.f32.mrf.mxu0
    %v1471 = vadd.f32 %v1422, %v1470
    %1472 = vmatmul.bf16.gmra.mxu0 %v248
    %v1473 = vpop.f32.mrf.mxu0
    %v1474 = vadd.f32 %v1425, %v1473
    %v1475 = vpop.f32.mrf.mxu0
    %v1476 = vadd.f32 %v1427, %v1475
    %1477 = vmatmul.bf16.gmra.mxu0 %v250
    %v1478 = vpop.f32.mrf.mxu0
    %v1479 = vadd.f32 %v1430, %v1478
    %v1480 = vpop.f32.mrf.mxu0
    %v1481 = vadd.f32 %v1432, %v1480
    %1482 = vmatmul.bf16.gmra.mxu0 %v252
    %v1483 = vpop.f32.mrf.mxu0
    %v1484 = vadd.f32 %v1435, %v1483
    %v1485 = vpop.f32.mrf.mxu0
    %v1486 = vadd.f32 %v1437, %v1485
    %1487 = vmatmul.bf16.gmra.mxu0 %v254
    %v1488 = vpop.f32.mrf.mxu0
    %v1489 = vadd.f32 %v1440, %v1488
    %v1490 = vpop.f32.mrf.mxu0
    %v1491 = vadd.f32 %v1442, %v1490
    %1492 = vmatmul.bf16.gmra.mxu0 %v256
    %v1493 = vpop.f32.mrf.mxu0
    %v1494 = vadd.f32 %v1445, %v1493
    %v1495 = vpop.f32.mrf.mxu0
    %v1496 = vadd.f32 %v1447, %v1495
    %1497 = vmatmul.bf16.gmra.mxu0 %v258
    %v1498 = vpop.f32.mrf.mxu0
    %v1499 = vadd.f32 %v1450, %v1498
    %v1500 = vpop.f32.mrf.mxu0
    %v1501 = vadd.f32 %v1452, %v1500
    %1502 = vdwg.mxu0
    %1503 = vmatpush.bf16.msra.mxu0 %v721
    %1504 = vmatpush.bf16.msra.mxu0 %v713
    %1505 = vmatpush.bf16.msra.mxu0 %v705
    %1506 = vmatpush.bf16.msra.mxu0 %v697
    %1507 = vmatpush.bf16.msra.mxu0 %v689
    %1508 = vmatpush.bf16.msra.mxu0 %v681
    %1509 = vmatpush.bf16.msra.mxu0 %v673
    %1510 = vmatpush.bf16.msra.mxu0 %v665
    %1511 = vmatmul.bf16.gmra.mxu0 %v243
    %v1512 = vpop.f32.mrf.mxu0
    %v1513 = vadd.f32 0.0, %v1512
    %v1514 = vpop.f32.mrf.mxu0
    %v1515 = vadd.f32 0.0, %v1514
    %1516 = vmatmul.bf16.gmra.mxu0 %v245
    %v1517 = vpop.f32.mrf.mxu0
    %v1518 = vadd.f32 0.0, %v1517
    %v1519 = vpop.f32.mrf.mxu0
    %v1520 = vadd.f32 0.0, %v1519
    %1521 = vmatmul.bf16.gmra.mxu0 %v247
    %v1522 = vpop.f32.mrf.mxu0
    %v1523 = vadd.f32 0.0, %v1522
    %v1524 = vpop.f32.mrf.mxu0
    %v1525 = vadd.f32 0.0, %v1524
    %1526 = vmatmul.bf16.gmra.mxu0 %v249
    %v1527 = vpop.f32.mrf.mxu0
    %v1528 = vadd.f32 0.0, %v1527
    %v1529 = vpop.f32.mrf.mxu0
    %v1530 = vadd.f32 0.0, %v1529
    %1531 = vmatmul.bf16.gmra.mxu0 %v251
    %v1532 = vpop.f32.mrf.mxu0
    %v1533 = vadd.f32 0.0, %v1532
    %v1534 = vpop.f32.mrf.mxu0
    %v1535 = vadd.f32 0.0, %v1534
    %1536 = vmatmul.bf16.gmra.mxu0 %v253
    %v1537 = vpop.f32.mrf.mxu0
    %v1538 = vadd.f32 0.0, %v1537
    %v1539 = vpop.f32.mrf.mxu0
    %v1540 = vadd.f32 0.0, %v1539
    %1541 = vmatmul.bf16.gmra.mxu0 %v255
    %v1542 = vpop.f32.mrf.mxu0
    %v1543 = vadd.f32 0.0, %v1542
    %v1544 = vpop.f32.mrf.mxu0
    %v1545 = vadd.f32 0.0, %v1544
    %1546 = vmatmul.bf16.gmra.mxu0 %v257
    %v1547 = vpop.f32.mrf.mxu0
    %v1548 = vadd.f32 0.0, %v1547
    %v1549 = vpop.f32.mrf.mxu0
    %v1550 = vadd.f32 0.0, %v1549
    %1551 = vdwg.mxu0
    %1552 = vmatpush.bf16.msra.mxu0 %v785
    %1553 = vmatpush.bf16.msra.mxu0 %v777
    %1554 = vmatpush.bf16.msra.mxu0 %v769
    %1555 = vmatpush.bf16.msra.mxu0 %v761
    %1556 = vmatpush.bf16.msra.mxu0 %v753
    %1557 = vmatpush.bf16.msra.mxu0 %v745
    %1558 = vmatpush.bf16.msra.mxu0 %v737
    %1559 = vmatpush.bf16.msra.mxu0 %v729
    %1560 = vmatmul.bf16.gmra.mxu0 %v244
    %v1561 = vpop.f32.mrf.mxu0
    %v1562 = vadd.f32 %v1513, %v1561
    %v1563 = vpop.f32.mrf.mxu0
    %v1564 = vadd.f32 %v1515, %v1563
    %1565 = vmatmul.bf16.gmra.mxu0 %v246
    %v1566 = vpop.f32.mrf.mxu0
    %v1567 = vadd.f32 %v1518, %v1566
    %v1568 = vpop.f32.mrf.mxu0
    %v1569 = vadd.f32 %v1520, %v1568
    %1570 = vmatmul.bf16.gmra.mxu0 %v248
    %v1571 = vpop.f32.mrf.mxu0
    %v1572 = vadd.f32 %v1523, %v1571
    %v1573 = vpop.f32.mrf.mxu0
    %v1574 = vadd.f32 %v1525, %v1573
    %1575 = vmatmul.bf16.gmra.mxu0 %v250
    %v1576 = vpop.f32.mrf.mxu0
    %v1577 = vadd.f32 %v1528, %v1576
    %v1578 = vpop.f32.mrf.mxu0
    %v1579 = vadd.f32 %v1530, %v1578
    %1580 = vmatmul.bf16.gmra.mxu0 %v252
    %v1581 = vpop.f32.mrf.mxu0
    %v1582 = vadd.f32 %v1533, %v1581
    %v1583 = vpop.f32.mrf.mxu0
    %v1584 = vadd.f32 %v1535, %v1583
    %1585 = vmatmul.bf16.gmra.mxu0 %v254
    %v1586 = vpop.f32.mrf.mxu0
    %v1587 = vadd.f32 %v1538, %v1586
    %v1588 = vpop.f32.mrf.mxu0
    %v1589 = vadd.f32 %v1540, %v1588
    %1590 = vmatmul.bf16.gmra.mxu0 %v256
    %v1591 = vpop.f32.mrf.mxu0
    %v1592 = vadd.f32 %v1543, %v1591
    %v1593 = vpop.f32.mrf.mxu0
    %v1594 = vadd.f32 %v1545, %v1593
    %1595 = vmatmul.bf16.gmra.mxu0 %v258
    %v1596 = vpop.f32.mrf.mxu0
    %v1597 = vadd.f32 %v1548, %v1596
    %v1598 = vpop.f32.mrf.mxu0
    %v1599 = vadd.f32 %v1550, %v1598
    %1600 = vdwg.mxu0
    %1601 = vmatpush.bf16.msra.mxu0 %v722
    %1602 = vmatpush.bf16.msra.mxu0 %v714
    %1603 = vmatpush.bf16.msra.mxu0 %v706
    %1604 = vmatpush.bf16.msra.mxu0 %v698
    %1605 = vmatpush.bf16.msra.mxu0 %v690
    %1606 = vmatpush.bf16.msra.mxu0 %v682
    %1607 = vmatpush.bf16.msra.mxu0 %v674
    %1608 = vmatpush.bf16.msra.mxu0 %v666
    %1609 = vmatmul.bf16.gmra.mxu0 %v243
    %v1610 = vpop.f32.mrf.mxu0
    %v1611 = vadd.f32 0.0, %v1610
    %v1612 = vpop.f32.mrf.mxu0
    %v1613 = vadd.f32 0.0, %v1612
    %1614 = vmatmul.bf16.gmra.mxu0 %v245
    %v1615 = vpop.f32.mrf.mxu0
    %v1616 = vadd.f32 0.0, %v1615
    %v1617 = vpop.f32.mrf.mxu0
    %v1618 = vadd.f32 0.0, %v1617
    %1619 = vmatmul.bf16.gmra.mxu0 %v247
    %v1620 = vpop.f32.mrf.mxu0
    %v1621 = vadd.f32 0.0, %v1620
    %v1622 = vpop.f32.mrf.mxu0
    %v1623 = vadd.f32 0.0, %v1622
    %1624 = vmatmul.bf16.gmra.mxu0 %v249
    %v1625 = vpop.f32.mrf.mxu0
    %v1626 = vadd.f32 0.0, %v1625
    %v1627 = vpop.f32.mrf.mxu0
    %v1628 = vadd.f32 0.0, %v1627
    %1629 = vmatmul.bf16.gmra.mxu0 %v251
    %v1630 = vpop.f32.mrf.mxu0
    %v1631 = vadd.f32 0.0, %v1630
    %v1632 = vpop.f32.mrf.mxu0
    %v1633 = vadd.f32 0.0, %v1632
    %1634 = vmatmul.bf16.gmra.mxu0 %v253
    %v1635 = vpop.f32.mrf.mxu0
    %v1636 = vadd.f32 0.0, %v1635
    %v1637 = vpop.f32.mrf.mxu0
    %v1638 = vadd.f32 0.0, %v1637
    %1639 = vmatmul.bf16.gmra.mxu0 %v255
    %v1640 = vpop.f32.mrf.mxu0
    %v1641 = vadd.f32 0.0, %v1640
    %v1642 = vpop.f32.mrf.mxu0
    %v1643 = vadd.f32 0.0, %v1642
    %1644 = vmatmul.bf16.gmra.mxu0 %v257
    %v1645 = vpop.f32.mrf.mxu0
    %v1646 = vadd.f32 0.0, %v1645
    %v1647 = vpop.f32.mrf.mxu0
    %v1648 = vadd.f32 0.0, %v1647
    %1649 = vdwg.mxu0
    %1650 = vmatpush.bf16.msra.mxu0 %v786
    %1651 = vmatpush.bf16.msra.mxu0 %v778
    %1652 = vmatpush.bf16.msra.mxu0 %v770
    %1653 = vmatpush.bf16.msra.mxu0 %v762
    %1654 = vmatpush.bf16.msra.mxu0 %v754
    %1655 = vmatpush.bf16.msra.mxu0 %v746
    %1656 = vmatpush.bf16.msra.mxu0 %v738
    %1657 = vmatpush.bf16.msra.mxu0 %v730
    %1658 = vmatmul.bf16.gmra.mxu0 %v244
    %v1659 = vpop.f32.mrf.mxu0
    %v1660 = vadd.f32 %v1611, %v1659
    %v1661 = vpop.f32.mrf.mxu0
    %v1662 = vadd.f32 %v1613, %v1661
    %1663 = vmatmul.bf16.gmra.mxu0 %v246
    %v1664 = vpop.f32.mrf.mxu0
    %v1665 = vadd.f32 %v1616, %v1664
    %v1666 = vpop.f32.mrf.mxu0
    %v1667 = vadd.f32 %v1618, %v1666
    %1668 = vmatmul.bf16.gmra.mxu0 %v248
    %v1669 = vpop.f32.mrf.mxu0
    %v1670 = vadd.f32 %v1621, %v1669
    %v1671 = vpop.f32.mrf.mxu0
    %v1672 = vadd.f32 %v1623, %v1671
    %1673 = vmatmul.bf16.gmra.mxu0 %v250
    %v1674 = vpop.f32.mrf.mxu0
    %v1675 = vadd.f32 %v1626, %v1674
    %v1676 = vpop.f32.mrf.mxu0
    %v1677 = vadd.f32 %v1628, %v1676
    %1678 = vmatmul.bf16.gmra.mxu0 %v252
    %v1679 = vpop.f32.mrf.mxu0
    %v1680 = vadd.f32 %v1631, %v1679
    %v1681 = vpop.f32.mrf.mxu0
    %v1682 = vadd.f32 %v1633, %v1681
    %1683 = vmatmul.bf16.gmra.mxu0 %v254
    %v1684 = vpop.f32.mrf.mxu0
    %v1685 = vadd.f32 %v1636, %v1684
    %v1686 = vpop.f32.mrf.mxu0
    %v1687 = vadd.f32 %v1638, %v1686
    %1688 = vmatmul.bf16.gmra.mxu0 %v256
    %v1689 = vpop.f32.mrf.mxu0
    %v1690 = vadd.f32 %v1641, %v1689
    %v1691 = vpop.f32.mrf.mxu0
    %v1692 = vadd.f32 %v1643, %v1691
    %1693 = vmatmul.bf16.gmra.mxu0 %v258
    %v1694 = vpop.f32.mrf.mxu0
    %v1695 = vadd.f32 %v1646, %v1694
    %v1696 = vpop.f32.mrf.mxu0
    %v1697 = vadd.f32 %v1648, %v1696
    %1698 = vdwg.mxu0
    %v1699 = vsub.f32 0.0, %v974
    %v1700 = vsub.f32 0.0, %v1072
    %v1701 = vsub.f32 0.0, %v1170
    %v1702 = vsub.f32 0.0, %v1268
    %v1703 = vsub.f32 0.0, %v976
    %v1704 = vsub.f32 0.0, %v1074
    %v1705 = vsub.f32 0.0, %v1172
    %v1706 = vsub.f32 0.0, %v1270
    %v1707 = vsub.f32 0.0, %v979
    %v1708 = vsub.f32 0.0, %v1077
    %v1709 = vsub.f32 0.0, %v1175
    %v1710 = vsub.f32 0.0, %v1273
    %v1711 = vsub.f32 0.0, %v981
    %v1712 = vsub.f32 0.0, %v1079
    %v1713 = vsub.f32 0.0, %v1177
    %v1714 = vsub.f32 0.0, %v1275
    %v1715 = vsub.f32 0.0, %v984
    %v1716 = vsub.f32 0.0, %v1082
    %v1717 = vsub.f32 0.0, %v1180
    %v1718 = vsub.f32 0.0, %v1278
    %v1719 = vsub.f32 0.0, %v986
    %v1720 = vsub.f32 0.0, %v1084
    %v1721 = vsub.f32 0.0, %v1182
    %v1722 = vsub.f32 0.0, %v1280
    %v1723 = vsub.f32 0.0, %v989
    %v1724 = vsub.f32 0.0, %v1087
    %v1725 = vsub.f32 0.0, %v1185
    %v1726 = vsub.f32 0.0, %v1283
    %v1727 = vsub.f32 0.0, %v991
    %v1728 = vsub.f32 0.0, %v1089
    %v1729 = vsub.f32 0.0, %v1187
    %v1730 = vsub.f32 0.0, %v1285
    %v1731 = vsub.f32 0.0, %v994
    %v1732 = vsub.f32 0.0, %v1092
    %v1733 = vsub.f32 0.0, %v1190
    %v1734 = vsub.f32 0.0, %v1288
    %v1735 = vsub.f32 0.0, %v996
    %v1736 = vsub.f32 0.0, %v1094
    %v1737 = vsub.f32 0.0, %v1192
    %v1738 = vsub.f32 0.0, %v1290
    %v1739 = vsub.f32 0.0, %v999
    %v1740 = vsub.f32 0.0, %v1097
    %v1741 = vsub.f32 0.0, %v1195
    %v1742 = vsub.f32 0.0, %v1293
    %v1743 = vsub.f32 0.0, %v1001
    %v1744 = vsub.f32 0.0, %v1099
    %v1745 = vsub.f32 0.0, %v1197
    %v1746 = vsub.f32 0.0, %v1295
    %v1747 = vsub.f32 0.0, %v1004
    %v1748 = vsub.f32 0.0, %v1102
    %v1749 = vsub.f32 0.0, %v1200
    %v1750 = vsub.f32 0.0, %v1298
    %v1751 = vsub.f32 0.0, %v1006
    %v1752 = vsub.f32 0.0, %v1104
    %v1753 = vsub.f32 0.0, %v1202
    %v1754 = vsub.f32 0.0, %v1300
    %v1755 = vsub.f32 0.0, %v1009
    %v1756 = vsub.f32 0.0, %v1107
    %v1757 = vsub.f32 0.0, %v1205
    %v1758 = vsub.f32 0.0, %v1303
    %v1759 = vsub.f32 0.0, %v1011
    %v1760 = vsub.f32 0.0, %v1109
    %v1761 = vsub.f32 0.0, %v1207
    %v1762 = vsub.f32 0.0, %v1305
    %v1763 = vmul.f32 %v1699, 1.442695
    %v1764 = vpow.pop %v1763
    %v1765 = vmul.f32 %v1700, 1.442695
    %v1766 = vpow.pop %v1765
    %v1767 = vmul.f32 %v1701, 1.442695
    %v1768 = vpow.pop %v1767
    %v1769 = vmul.f32 %v1702, 1.442695
    %v1770 = vpow.pop %v1769
    %v1771 = vmul.f32 %v1703, 1.442695
    %v1772 = vpow.pop %v1771
    %v1773 = vmul.f32 %v1704, 1.442695
    %v1774 = vpow.pop %v1773
    %v1775 = vmul.f32 %v1705, 1.442695
    %v1776 = vpow.pop %v1775
    %v1777 = vmul.f32 %v1706, 1.442695
    %v1778 = vpow.pop %v1777
    %v1779 = vmul.f32 %v1707, 1.442695
    %v1780 = vpow.pop %v1779
    %v1781 = vmul.f32 %v1708, 1.442695
    %v1782 = vpow.pop %v1781
    %v1783 = vmul.f32 %v1709, 1.442695
    %v1784 = vpow.pop %v1783
    %v1785 = vmul.f32 %v1710, 1.442695
    %v1786 = vpow.pop %v1785
    %v1787 = vmul.f32 %v1711, 1.442695
    %v1788 = vpow.pop %v1787
    %v1789 = vmul.f32 %v1712, 1.442695
    %v1790 = vpow.pop %v1789
    %v1791 = vmul.f32 %v1713, 1.442695
    %v1792 = vpow.pop %v1791
    %v1793 = vmul.f32 %v1714, 1.442695
    %v1794 = vpow.pop %v1793
    %v1795 = vmul.f32 %v1715, 1.442695
    %v1796 = vpow.pop %v1795
    %v1797 = vmul.f32 %v1716, 1.442695
    %v1798 = vpow.pop %v1797
    %v1799 = vmul.f32 %v1717, 1.442695
    %v1800 = vpow.pop %v1799
    %v1801 = vmul.f32 %v1718, 1.442695
    %v1802 = vpow.pop %v1801
    %v1803 = vmul.f32 %v1719, 1.442695
    %v1804 = vpow.pop %v1803
    %v1805 = vmul.f32 %v1720, 1.442695
    %v1806 = vpow.pop %v1805
    %v1807 = vmul.f32 %v1721, 1.442695
    %v1808 = vpow.pop %v1807
    %v1809 = vmul.f32 %v1722, 1.442695
    %v1810 = vpow.pop %v1809
    %v1811 = vmul.f32 %v1723, 1.442695
    %v1812 = vpow.pop %v1811
    %v1813 = vmul.f32 %v1724, 1.442695
    %v1814 = vpow.pop %v1813
    %v1815 = vmul.f32 %v1725, 1.442695
    %v1816 = vpow.pop %v1815
    %v1817 = vmul.f32 %v1726, 1.442695
    %v1818 = vpow.pop %v1817
    %v1819 = vmul.f32 %v1727, 1.442695
    %v1820 = vpow.pop %v1819
    %v1821 = vmul.f32 %v1728, 1.442695
    %v1822 = vpow.pop %v1821
    %v1823 = vmul.f32 %v1729, 1.442695
    %v1824 = vpow.pop %v1823
    %v1825 = vmul.f32 %v1730, 1.442695
    %v1826 = vpow.pop %v1825
    %v1827 = vmul.f32 %v1731, 1.442695
    %v1828 = vpow.pop %v1827
    %v1829 = vmul.f32 %v1732, 1.442695
    %v1830 = vpow.pop %v1829
    %v1831 = vmul.f32 %v1733, 1.442695
    %v1832 = vpow.pop %v1831
    %v1833 = vmul.f32 %v1734, 1.442695
    %v1834 = vpow.pop %v1833
    %v1835 = vmul.f32 %v1735, 1.442695
    %v1836 = vpow.pop %v1835
    %v1837 = vmul.f32 %v1736, 1.442695
    %v1838 = vpow.pop %v1837
    %v1839 = vmul.f32 %v1737, 1.442695
    %v1840 = vpow.pop %v1839
    %v1841 = vmul.f32 %v1738, 1.442695
    %v1842 = vpow.pop %v1841
    %v1843 = vmul.f32 %v1739, 1.442695
    %v1844 = vpow.pop %v1843
    %v1845 = vmul.f32 %v1740, 1.442695
    %v1846 = vpow.pop %v1845
    %v1847 = vmul.f32 %v1741, 1.442695
    %v1848 = vpow.pop %v1847
    %v1849 = vmul.f32 %v1742, 1.442695
    %v1850 = vpow.pop %v1849
    %v1851 = vmul.f32 %v1743, 1.442695
    %v1852 = vpow.pop %v1851
    %v1853 = vmul.f32 %v1744, 1.442695
    %v1854 = vpow.pop %v1853
    %v1855 = vmul.f32 %v1745, 1.442695
    %v1856 = vpow.pop %v1855
    %v1857 = vmul.f32 %v1746, 1.442695
    %v1858 = vpow.pop %v1857
    %v1859 = vmul.f32 %v1747, 1.442695
    %v1860 = vpow.pop %v1859
    %v1861 = vmul.f32 %v1748, 1.442695
    %v1862 = vpow.pop %v1861
    %v1863 = vmul.f32 %v1749, 1.442695
    %v1864 = vpow.pop %v1863
    %v1865 = vmul.f32 %v1750, 1.442695
    %v1866 = vpow.pop %v1865
    %v1867 = vmul.f32 %v1751, 1.442695
    %v1868 = vpow.pop %v1867
    %v1869 = vmul.f32 %v1752, 1.442695
    %v1870 = vpow.pop %v1869
    %v1871 = vmul.f32 %v1753, 1.442695
    %v1872 = vpow.pop %v1871
    %v1873 = vmul.f32 %v1754, 1.442695
    %v1874 = vpow.pop %v1873
    %v1875 = vmul.f32 %v1755, 1.442695
    %v1876 = vpow.pop %v1875
    %v1877 = vmul.f32 %v1756, 1.442695
    %v1878 = vpow.pop %v1877
    %v1879 = vmul.f32 %v1757, 1.442695
    %v1880 = vpow.pop %v1879
    %v1881 = vmul.f32 %v1758, 1.442695
    %v1882 = vpow.pop %v1881
    %v1883 = vmul.f32 %v1759, 1.442695
    %v1884 = vpow.pop %v1883
    %v1885 = vmul.f32 %v1760, 1.442695
    %v1886 = vpow.pop %v1885
    %v1887 = vmul.f32 %v1761, 1.442695
    %v1888 = vpow.pop %v1887
    %v1889 = vmul.f32 %v1762, 1.442695
    %v1890 = vpow.pop %v1889
    %v1891 = vadd.f32 %v1764, 1.0
    %v1892 = vadd.f32 %v1766, 1.0
    %v1893 = vadd.f32 %v1768, 1.0
    %v1894 = vadd.f32 %v1770, 1.0
    %v1895 = vadd.f32 %v1772, 1.0
    %v1896 = vadd.f32 %v1774, 1.0
    %v1897 = vadd.f32 %v1776, 1.0
    %v1898 = vadd.f32 %v1778, 1.0
    %v1899 = vadd.f32 %v1780, 1.0
    %v1900 = vadd.f32 %v1782, 1.0
    %v1901 = vadd.f32 %v1784, 1.0
    %v1902 = vadd.f32 %v1786, 1.0
    %v1903 = vadd.f32 %v1788, 1.0
    %v1904 = vadd.f32 %v1790, 1.0
    %v1905 = vadd.f32 %v1792, 1.0
    %v1906 = vadd.f32 %v1794, 1.0
    %v1907 = vadd.f32 %v1796, 1.0
    %v1908 = vadd.f32 %v1798, 1.0
    %v1909 = vadd.f32 %v1800, 1.0
    %v1910 = vadd.f32 %v1802, 1.0
    %v1911 = vadd.f32 %v1804, 1.0
    %v1912 = vadd.f32 %v1806, 1.0
    %v1913 = vadd.f32 %v1808, 1.0
    %v1914 = vadd.f32 %v1810, 1.0
    %v1915 = vadd.f32 %v1812, 1.0
    %v1916 = vadd.f32 %v1814, 1.0
    %v1917 = vadd.f32 %v1816, 1.0
    %v1918 = vadd.f32 %v1818, 1.0
    %v1919 = vadd.f32 %v1820, 1.0
    %v1920 = vadd.f32 %v1822, 1.0
    %v1921 = vadd.f32 %v1824, 1.0
    %v1922 = vadd.f32 %v1826, 1.0
    %v1923 = vadd.f32 %v1828, 1.0
    %v1924 = vadd.f32 %v1830, 1.0
    %v1925 = vadd.f32 %v1832, 1.0
    %v1926 = vadd.f32 %v1834, 1.0
    %v1927 = vadd.f32 %v1836, 1.0
    %v1928 = vadd.f32 %v1838, 1.0
    %v1929 = vadd.f32 %v1840, 1.0
    %v1930 = vadd.f32 %v1842, 1.0
    %v1931 = vadd.f32 %v1844, 1.0
    %v1932 = vadd.f32 %v1846, 1.0
    %v1933 = vadd.f32 %v1848, 1.0
    %v1934 = vadd.f32 %v1850, 1.0
    %v1935 = vadd.f32 %v1852, 1.0
    %v1936 = vadd.f32 %v1854, 1.0
    %v1937 = vadd.f32 %v1856, 1.0
    %v1938 = vadd.f32 %v1858, 1.0
    %v1939 = vadd.f32 %v1860, 1.0
    %v1940 = vadd.f32 %v1862, 1.0
    %v1941 = vadd.f32 %v1864, 1.0
    %v1942 = vadd.f32 %v1866, 1.0
    %v1943 = vadd.f32 %v1868, 1.0
    %v1944 = vadd.f32 %v1870, 1.0
    %v1945 = vadd.f32 %v1872, 1.0
    %v1946 = vadd.f32 %v1874, 1.0
    %v1947 = vadd.f32 %v1876, 1.0
    %v1948 = vadd.f32 %v1878, 1.0
    %v1949 = vadd.f32 %v1880, 1.0
    %v1950 = vadd.f32 %v1882, 1.0
    %v1951 = vadd.f32 %v1884, 1.0
    %v1952 = vadd.f32 %v1886, 1.0
    %v1953 = vadd.f32 %v1888, 1.0
    %v1954 = vadd.f32 %v1890, 1.0
    %v1955 = vrcp.pop %v1891
    %v1956 = vrcp.pop %v1892
    %v1957 = vrcp.pop %v1893
    %v1958 = vrcp.pop %v1894
    %v1959 = vrcp.pop %v1895
    %v1960 = vrcp.pop %v1896
    %v1961 = vrcp.pop %v1897
    %v1962 = vrcp.pop %v1898
    %v1963 = vrcp.pop %v1899
    %v1964 = vrcp.pop %v1900
    %v1965 = vrcp.pop %v1901
    %v1966 = vrcp.pop %v1902
    %v1967 = vrcp.pop %v1903
    %v1968 = vrcp.pop %v1904
    %v1969 = vrcp.pop %v1905
    %v1970 = vrcp.pop %v1906
    %v1971 = vrcp.pop %v1907
    %v1972 = vrcp.pop %v1908
    %v1973 = vrcp.pop %v1909
    %v1974 = vrcp.pop %v1910
    %v1975 = vrcp.pop %v1911
    %v1976 = vrcp.pop %v1912
    %v1977 = vrcp.pop %v1913
    %v1978 = vrcp.pop %v1914
    %v1979 = vrcp.pop %v1915
    %v1980 = vrcp.pop %v1916
    %v1981 = vrcp.pop %v1917
    %v1982 = vrcp.pop %v1918
    %v1983 = vrcp.pop %v1919
    %v1984 = vrcp.pop %v1920
    %v1985 = vrcp.pop %v1921
    %v1986 = vrcp.pop %v1922
    %v1987 = vrcp.pop %v1923
    %v1988 = vrcp.pop %v1924
    %v1989 = vrcp.pop %v1925
    %v1990 = vrcp.pop %v1926
    %v1991 = vrcp.pop %v1927
    %v1992 = vrcp.pop %v1928
    %v1993 = vrcp.pop %v1929
    %v1994 = vrcp.pop %v1930
    %v1995 = vrcp.pop %v1931
    %v1996 = vrcp.pop %v1932
    %v1997 = vrcp.pop %v1933
    %v1998 = vrcp.pop %v1934
    %v1999 = vrcp.pop %v1935
    %v2000 = vrcp.pop %v1936
    %v2001 = vrcp.pop %v1937
    %v2002 = vrcp.pop %v1938
    %v2003 = vrcp.pop %v1939
    %v2004 = vrcp.pop %v1940
    %v2005 = vrcp.pop %v1941
    %v2006 = vrcp.pop %v1942
    %v2007 = vrcp.pop %v1943
    %v2008 = vrcp.pop %v1944
    %v2009 = vrcp.pop %v1945
    %v2010 = vrcp.pop %v1946
    %v2011 = vrcp.pop %v1947
    %v2012 = vrcp.pop %v1948
    %v2013 = vrcp.pop %v1949
    %v2014 = vrcp.pop %v1950
    %v2015 = vrcp.pop %v1951
    %v2016 = vrcp.pop %v1952
    %v2017 = vrcp.pop %v1953
    %v2018 = vrcp.pop %v1954
    %v2019 = vmul.f32 %v974, %v1955
    %v2020 = vmul.f32 %v1072, %v1956
    %v2021 = vmul.f32 %v1170, %v1957
    %v2022 = vmul.f32 %v1268, %v1958
    %v2023 = vmul.f32 %v976, %v1959
    %v2024 = vmul.f32 %v1074, %v1960
    %v2025 = vmul.f32 %v1172, %v1961
    %v2026 = vmul.f32 %v1270, %v1962
    %v2027 = vmul.f32 %v979, %v1963
    %v2028 = vmul.f32 %v1077, %v1964
    %v2029 = vmul.f32 %v1175, %v1965
    %v2030 = vmul.f32 %v1273, %v1966
    %v2031 = vmul.f32 %v981, %v1967
    %v2032 = vmul.f32 %v1079, %v1968
    %v2033 = vmul.f32 %v1177, %v1969
    %v2034 = vmul.f32 %v1275, %v1970
    %v2035 = vmul.f32 %v984, %v1971
    %v2036 = vmul.f32 %v1082, %v1972
    %v2037 = vmul.f32 %v1180, %v1973
    %v2038 = vmul.f32 %v1278, %v1974
    %v2039 = vmul.f32 %v986, %v1975
    %v2040 = vmul.f32 %v1084, %v1976
    %v2041 = vmul.f32 %v1182, %v1977
    %v2042 = vmul.f32 %v1280, %v1978
    %v2043 = vmul.f32 %v989, %v1979
    %v2044 = vmul.f32 %v1087, %v1980
    %v2045 = vmul.f32 %v1185, %v1981
    %v2046 = vmul.f32 %v1283, %v1982
    %v2047 = vmul.f32 %v991, %v1983
    %v2048 = vmul.f32 %v1089, %v1984
    %v2049 = vmul.f32 %v1187, %v1985
    %v2050 = vmul.f32 %v1285, %v1986
    %v2051 = vmul.f32 %v994, %v1987
    %v2052 = vmul.f32 %v1092, %v1988
    %v2053 = vmul.f32 %v1190, %v1989
    %v2054 = vmul.f32 %v1288, %v1990
    %v2055 = vmul.f32 %v996, %v1991
    %v2056 = vmul.f32 %v1094, %v1992
    %v2057 = vmul.f32 %v1192, %v1993
    %v2058 = vmul.f32 %v1290, %v1994
    %v2059 = vmul.f32 %v999, %v1995
    %v2060 = vmul.f32 %v1097, %v1996
    %v2061 = vmul.f32 %v1195, %v1997
    %v2062 = vmul.f32 %v1293, %v1998
    %v2063 = vmul.f32 %v1001, %v1999
    %v2064 = vmul.f32 %v1099, %v2000
    %v2065 = vmul.f32 %v1197, %v2001
    %v2066 = vmul.f32 %v1295, %v2002
    %v2067 = vmul.f32 %v1004, %v2003
    %v2068 = vmul.f32 %v1102, %v2004
    %v2069 = vmul.f32 %v1200, %v2005
    %v2070 = vmul.f32 %v1298, %v2006
    %v2071 = vmul.f32 %v1006, %v2007
    %v2072 = vmul.f32 %v1104, %v2008
    %v2073 = vmul.f32 %v1202, %v2009
    %v2074 = vmul.f32 %v1300, %v2010
    %v2075 = vmul.f32 %v1009, %v2011
    %v2076 = vmul.f32 %v1107, %v2012
    %v2077 = vmul.f32 %v1205, %v2013
    %v2078 = vmul.f32 %v1303, %v2014
    %v2079 = vmul.f32 %v1011, %v2015
    %v2080 = vmul.f32 %v1109, %v2016
    %v2081 = vmul.f32 %v1207, %v2017
    %v2082 = vmul.f32 %v1305, %v2018
    %v2083 = vmul.f32 %v2019, %v1366
    %v2084 = vmul.f32 %v2020, %v1464
    %v2085 = vmul.f32 %v2021, %v1562
    %v2086 = vmul.f32 %v2022, %v1660
    %v2087 = vmul.f32 %v2023, %v1368
    %v2088 = vmul.f32 %v2024, %v1466
    %v2089 = vmul.f32 %v2025, %v1564
    %v2090 = vmul.f32 %v2026, %v1662
    %v2091 = vmul.f32 %v2027, %v1371
    %v2092 = vmul.f32 %v2028, %v1469
    %v2093 = vmul.f32 %v2029, %v1567
    %v2094 = vmul.f32 %v2030, %v1665
    %v2095 = vmul.f32 %v2031, %v1373
    %v2096 = vmul.f32 %v2032, %v1471
    %v2097 = vmul.f32 %v2033, %v1569
    %v2098 = vmul.f32 %v2034, %v1667
    %v2099 = vmul.f32 %v2035, %v1376
    %v2100 = vmul.f32 %v2036, %v1474
    %v2101 = vmul.f32 %v2037, %v1572
    %v2102 = vmul.f32 %v2038, %v1670
    %v2103 = vmul.f32 %v2039, %v1378
    %v2104 = vmul.f32 %v2040, %v1476
    %v2105 = vmul.f32 %v2041, %v1574
    %v2106 = vmul.f32 %v2042, %v1672
    %v2107 = vmul.f32 %v2043, %v1381
    %v2108 = vmul.f32 %v2044, %v1479
    %v2109 = vmul.f32 %v2045, %v1577
    %v2110 = vmul.f32 %v2046, %v1675
    %v2111 = vmul.f32 %v2047, %v1383
    %v2112 = vmul.f32 %v2048, %v1481
    %v2113 = vmul.f32 %v2049, %v1579
    %v2114 = vmul.f32 %v2050, %v1677
    %v2115 = vmul.f32 %v2051, %v1386
    %v2116 = vmul.f32 %v2052, %v1484
    %v2117 = vmul.f32 %v2053, %v1582
    %v2118 = vmul.f32 %v2054, %v1680
    %v2119 = vmul.f32 %v2055, %v1388
    %v2120 = vmul.f32 %v2056, %v1486
    %v2121 = vmul.f32 %v2057, %v1584
    %v2122 = vmul.f32 %v2058, %v1682
    %v2123 = vmul.f32 %v2059, %v1391
    %v2124 = vmul.f32 %v2060, %v1489
    %v2125 = vmul.f32 %v2061, %v1587
    %v2126 = vmul.f32 %v2062, %v1685
    %v2127 = vmul.f32 %v2063, %v1393
    %v2128 = vmul.f32 %v2064, %v1491
    %v2129 = vmul.f32 %v2065, %v1589
    %v2130 = vmul.f32 %v2066, %v1687
    %v2131 = vmul.f32 %v2067, %v1396
    %v2132 = vmul.f32 %v2068, %v1494
    %v2133 = vmul.f32 %v2069, %v1592
    %v2134 = vmul.f32 %v2070, %v1690
    %v2135 = vmul.f32 %v2071, %v1398
    %v2136 = vmul.f32 %v2072, %v1496
    %v2137 = vmul.f32 %v2073, %v1594
    %v2138 = vmul.f32 %v2074, %v1692
    %v2139 = vmul.f32 %v2075, %v1401
    %v2140 = vmul.f32 %v2076, %v1499
    %v2141 = vmul.f32 %v2077, %v1597
    %v2142 = vmul.f32 %v2078, %v1695
    %v2143 = vmul.f32 %v2079, %v1403
    %v2144 = vmul.f32 %v2080, %v1501
    %v2145 = vmul.f32 %v2081, %v1599
    %v2146 = vmul.f32 %v2082, %v1697
    %v2147 = vld [vmem:[#allocation2] sm:$0xff]
    %v2148 = vld [vmem:[#allocation2 + $0x8] sm:$0xff]
    %v2149 = vld [vmem:[#allocation2 + $0x10] sm:$0xff]
    %v2150 = vld [vmem:[#allocation2 + $0x18] sm:$0xff]
    %v2151 = vld [vmem:[#allocation2 + $0x20] sm:$0xff]
    %v2152 = vld [vmem:[#allocation2 + $0x28] sm:$0xff]
    %v2153 = vld [vmem:[#allocation2 + $0x30] sm:$0xff]
    %v2154 = vld [vmem:[#allocation2 + $0x38] sm:$0xff]
    %v2155 = vld [vmem:[#allocation2 + $0x40] sm:$0xff]
    %v2156 = vld [vmem:[#allocation2 + $0x48] sm:$0xff]
    %v2157 = vld [vmem:[#allocation2 + $0x50] sm:$0xff]
    %v2158 = vld [vmem:[#allocation2 + $0x58] sm:$0xff]
    %v2159 = vld [vmem:[#allocation2 + $0x60] sm:$0xff]
    %v2160 = vld [vmem:[#allocation2 + $0x68] sm:$0xff]
    %v2161 = vld [vmem:[#allocation2 + $0x70] sm:$0xff]
    %v2162 = vld [vmem:[#allocation2 + $0x78] sm:$0xff]
    %v2163 = vld [vmem:[#allocation2 + $0x80] sm:$0xff]
    %v2164 = vld [vmem:[#allocation2 + $0x88] sm:$0xff]
    %v2165 = vld [vmem:[#allocation2 + $0x90] sm:$0xff]
    %v2166 = vld [vmem:[#allocation2 + $0x98] sm:$0xff]
    %v2167 = vld [vmem:[#allocation2 + $0xa0] sm:$0xff]
    %v2168 = vld [vmem:[#allocation2 + $0xa8] sm:$0xff]
    %v2169 = vld [vmem:[#allocation2 + $0xb0] sm:$0xff]
    %v2170 = vld [vmem:[#allocation2 + $0xb8] sm:$0xff]
    %v2171 = vld [vmem:[#allocation2 + $0xc0] sm:$0xff]
    %v2172 = vld [vmem:[#allocation2 + $0xc8] sm:$0xff]
    %v2173 = vld [vmem:[#allocation2 + $0xd0] sm:$0xff]
    %v2174 = vld [vmem:[#allocation2 + $0xd8] sm:$0xff]
    %v2175 = vld [vmem:[#allocation2 + $0xe0] sm:$0xff]
    %v2176 = vld [vmem:[#allocation2 + $0xe8] sm:$0xff]
    %v2177 = vld [vmem:[#allocation2 + $0xf0] sm:$0xff]
    %v2178 = vld [vmem:[#allocation2 + $0xf8] sm:$0xff]
    %v2179 = vpack.c.bf16 %v2087, %v2083
    %v2180 = vpack.c.bf16 %v2088, %v2084
    %v2181 = vpack.c.bf16 %v2089, %v2085
    %v2182 = vpack.c.bf16 %v2090, %v2086
    %v2183 = vpack.c.bf16 %v2095, %v2091
    %v2184 = vpack.c.bf16 %v2096, %v2092
    %v2185 = vpack.c.bf16 %v2097, %v2093
    %v2186 = vpack.c.bf16 %v2098, %v2094
    %v2187 = vpack.c.bf16 %v2103, %v2099
    %v2188 = vpack.c.bf16 %v2104, %v2100
    %v2189 = vpack.c.bf16 %v2105, %v2101
    %v2190 = vpack.c.bf16 %v2106, %v2102
    %v2191 = vpack.c.bf16 %v2111, %v2107
    %v2192 = vpack.c.bf16 %v2112, %v2108
    %v2193 = vpack.c.bf16 %v2113, %v2109
    %v2194 = vpack.c.bf16 %v2114, %v2110
    %v2195 = vpack.c.bf16 %v2119, %v2115
    %v2196 = vpack.c.bf16 %v2120, %v2116
    %v2197 = vpack.c.bf16 %v2121, %v2117
    %v2198 = vpack.c.bf16 %v2122, %v2118
    %v2199 = vpack.c.bf16 %v2127, %v2123
    %v2200 = vpack.c.bf16 %v2128, %v2124
    %v2201 = vpack.c.bf16 %v2129, %v2125
    %v2202 = vpack.c.bf16 %v2130, %v2126
    %v2203 = vpack.c.bf16 %v2135, %v2131
    %v2204 = vpack.c.bf16 %v2136, %v2132
    %v2205 = vpack.c.bf16 %v2137, %v2133
    %v2206 = vpack.c.bf16 %v2138, %v2134
    %v2207 = vpack.c.bf16 %v2143, %v2139
    %v2208 = vpack.c.bf16 %v2144, %v2140
    %v2209 = vpack.c.bf16 %v2145, %v2141
    %v2210 = vpack.c.bf16 %v2146, %v2142
    %v2211 = vld [vmem:[%s2] sm:$0xff]
    %v2212 = vld [vmem:[%s2 + $0x8] sm:$0xff]
    %v2213 = vld [vmem:[%s2 + $0x10] sm:$0xff]
    %v2214 = vld [vmem:[%s2 + $0x18] sm:$0xff]
    %v2215 = vld [vmem:[%s2 + $0x20] sm:$0xff]
    %v2216 = vld [vmem:[%s2 + $0x28] sm:$0xff]
    %v2217 = vld [vmem:[%s2 + $0x30] sm:$0xff]
    %v2218 = vld [vmem:[%s2 + $0x38] sm:$0xff]
    %v2219 = vld [vmem:[%s2 + $0x40] sm:$0xff]
    %v2220 = vld [vmem:[%s2 + $0x48] sm:$0xff]
    %v2221 = vld [vmem:[%s2 + $0x50] sm:$0xff]
    %v2222 = vld [vmem:[%s2 + $0x58] sm:$0xff]
    %v2223 = vld [vmem:[%s2 + $0x60] sm:$0xff]
    %v2224 = vld [vmem:[%s2 + $0x68] sm:$0xff]
    %v2225 = vld [vmem:[%s2 + $0x70] sm:$0xff]
    %v2226 = vld [vmem:[%s2 + $0x78] sm:$0xff]
    %v2227 = vld [vmem:[%s2 + $0x80] sm:$0xff]
    %v2228 = vld [vmem:[%s2 + $0x88] sm:$0xff]
    %v2229 = vld [vmem:[%s2 + $0x90] sm:$0xff]
    %v2230 = vld [vmem:[%s2 + $0x98] sm:$0xff]
    %v2231 = vld [vmem:[%s2 + $0xa0] sm:$0xff]
    %v2232 = vld [vmem:[%s2 + $0xa8] sm:$0xff]
    %v2233 = vld [vmem:[%s2 + $0xb0] sm:$0xff]
    %v2234 = vld [vmem:[%s2 + $0xb8] sm:$0xff]
    %v2235 = vld [vmem:[%s2 + $0xc0] sm:$0xff]
    %v2236 = vld [vmem:[%s2 + $0xc8] sm:$0xff]
    %v2237 = vld [vmem:[%s2 + $0xd0] sm:$0xff]
    %v2238 = vld [vmem:[%s2 + $0xd8] sm:$0xff]
    %v2239 = vld [vmem:[%s2 + $0xe0] sm:$0xff]
    %v2240 = vld [vmem:[%s2 + $0xe8] sm:$0xff]
    %v2241 = vld [vmem:[%s2 + $0xf0] sm:$0xff]
    %v2242 = vld [vmem:[%s2 + $0xf8] sm:$0xff]
    %v2243 = vld [vmem:[%s2 + $0x100] sm:$0xff]
    %v2244 = vld [vmem:[%s2 + $0x108] sm:$0xff]
    %v2245 = vld [vmem:[%s2 + $0x110] sm:$0xff]
    %v2246 = vld [vmem:[%s2 + $0x118] sm:$0xff]
    %v2247 = vld [vmem:[%s2 + $0x120] sm:$0xff]
    %v2248 = vld [vmem:[%s2 + $0x128] sm:$0xff]
    %v2249 = vld [vmem:[%s2 + $0x130] sm:$0xff]
    %v2250 = vld [vmem:[%s2 + $0x138] sm:$0xff]
    %v2251 = vld [vmem:[%s2 + $0x140] sm:$0xff]
    %v2252 = vld [vmem:[%s2 + $0x148] sm:$0xff]
    %v2253 = vld [vmem:[%s2 + $0x150] sm:$0xff]
    %v2254 = vld [vmem:[%s2 + $0x158] sm:$0xff]
    %v2255 = vld [vmem:[%s2 + $0x160] sm:$0xff]
    %v2256 = vld [vmem:[%s2 + $0x168] sm:$0xff]
    %v2257 = vld [vmem:[%s2 + $0x170] sm:$0xff]
    %v2258 = vld [vmem:[%s2 + $0x178] sm:$0xff]
    %v2259 = vld [vmem:[%s2 + $0x180] sm:$0xff]
    %v2260 = vld [vmem:[%s2 + $0x188] sm:$0xff]
    %v2261 = vld [vmem:[%s2 + $0x190] sm:$0xff]
    %v2262 = vld [vmem:[%s2 + $0x198] sm:$0xff]
    %v2263 = vld [vmem:[%s2 + $0x1a0] sm:$0xff]
    %v2264 = vld [vmem:[%s2 + $0x1a8] sm:$0xff]
    %v2265 = vld [vmem:[%s2 + $0x1b0] sm:$0xff]
    %v2266 = vld [vmem:[%s2 + $0x1b8] sm:$0xff]
    %v2267 = vld [vmem:[%s2 + $0x1c0] sm:$0xff]
    %v2268 = vld [vmem:[%s2 + $0x1c8] sm:$0xff]
    %v2269 = vld [vmem:[%s2 + $0x1d0] sm:$0xff]
    %v2270 = vld [vmem:[%s2 + $0x1d8] sm:$0xff]
    %v2271 = vld [vmem:[%s2 + $0x1e0] sm:$0xff]
    %v2272 = vld [vmem:[%s2 + $0x1e8] sm:$0xff]
    %v2273 = vld [vmem:[%s2 + $0x1f0] sm:$0xff]
    %v2274 = vld [vmem:[%s2 + $0x1f8] sm:$0xff]
    %v2339 = vunpack.c.l.b16 %v2211
    %v2340 = vunpack.c.h.b16 %v2211
    %v2341 = vunpack.c.l.b16 %v2212
    %v2342 = vunpack.c.h.b16 %v2212
    %v2343 = vunpack.c.l.b16 %v2213
    %v2344 = vunpack.c.h.b16 %v2213
    %v2345 = vunpack.c.l.b16 %v2214
    %v2346 = vunpack.c.h.b16 %v2214
    %v2347 = vunpack.c.l.b16 %v2215
    %v2348 = vunpack.c.h.b16 %v2215
    %v2349 = vunpack.c.l.b16 %v2216
    %v2350 = vunpack.c.h.b16 %v2216
    %v2351 = vunpack.c.l.b16 %v2217
    %v2352 = vunpack.c.h.b16 %v2217
    %v2353 = vunpack.c.l.b16 %v2218
    %v2354 = vunpack.c.h.b16 %v2218
    %v2355 = vunpack.c.l.b16 %v2219
    %v2356 = vunpack.c.h.b16 %v2219
    %v2357 = vunpack.c.l.b16 %v2220
    %v2358 = vunpack.c.h.b16 %v2220
    %v2359 = vunpack.c.l.b16 %v2221
    %v2360 = vunpack.c.h.b16 %v2221
    %v2361 = vunpack.c.l.b16 %v2222
    %v2362 = vunpack.c.h.b16 %v2222
    %v2363 = vunpack.c.l.b16 %v2223
    %v2364 = vunpack.c.h.b16 %v2223
    %v2365 = vunpack.c.l.b16 %v2224
    %v2366 = vunpack.c.h.b16 %v2224
    %v2367 = vunpack.c.l.b16 %v2225
    %v2368 = vunpack.c.h.b16 %v2225
    %v2369 = vunpack.c.l.b16 %v2226
    %v2370 = vunpack.c.h.b16 %v2226
    %v2371 = vunpack.c.l.b16 %v2227
    %v2372 = vunpack.c.h.b16 %v2227
    %v2373 = vunpack.c.l.b16 %v2228
    %v2374 = vunpack.c.h.b16 %v2228
    %v2375 = vunpack.c.l.b16 %v2229
    %v2376 = vunpack.c.h.b16 %v2229
    %v2377 = vunpack.c.l.b16 %v2230
    %v2378 = vunpack.c.h.b16 %v2230
    %v2379 = vunpack.c.l.b16 %v2231
    %v2380 = vunpack.c.h.b16 %v2231
    %v2381 = vunpack.c.l.b16 %v2232
    %v2382 = vunpack.c.h.b16 %v2232
    %v2383 = vunpack.c.l.b16 %v2233
    %v2384 = vunpack.c.h.b16 %v2233
    %v2385 = vunpack.c.l.b16 %v2234
    %v2386 = vunpack.c.h.b16 %v2234
    %v2387 = vunpack.c.l.b16 %v2235
    %v2388 = vunpack.c.h.b16 %v2235
    %v2389 = vunpack.c.l.b16 %v2236
    %v2390 = vunpack.c.h.b16 %v2236
    %v2391 = vunpack.c.l.b16 %v2237
    %v2392 = vunpack.c.h.b16 %v2237
    %v2393 = vunpack.c.l.b16 %v2238
    %v2394 = vunpack.c.h.b16 %v2238
    %v2395 = vunpack.c.l.b16 %v2239
    %v2396 = vunpack.c.h.b16 %v2239
    %v2397 = vunpack.c.l.b16 %v2240
    %v2398 = vunpack.c.h.b16 %v2240
    %v2399 = vunpack.c.l.b16 %v2241
    %v2400 = vunpack.c.h.b16 %v2241
    %v2401 = vunpack.c.l.b16 %v2242
    %v2402 = vunpack.c.h.b16 %v2242
    %v2403 = vunpack.c.l.b16 %v2243
    %v2404 = vunpack.c.h.b16 %v2243
    %v2405 = vunpack.c.l.b16 %v2244
    %v2406 = vunpack.c.h.b16 %v2244
    %v2407 = vunpack.c.l.b16 %v2245
    %v2408 = vunpack.c.h.b16 %v2245
    %v2409 = vunpack.c.l.b16 %v2246
    %v2410 = vunpack.c.h.b16 %v2246
    %v2411 = vunpack.c.l.b16 %v2247
    %v2412 = vunpack.c.h.b16 %v2247
    %v2413 = vunpack.c.l.b16 %v2248
    %v2414 = vunpack.c.h.b16 %v2248
    %v2415 = vunpack.c.l.b16 %v2249
    %v2416 = vunpack.c.h.b16 %v2249
    %v2417 = vunpack.c.l.b16 %v2250
    %v2418 = vunpack.c.h.b16 %v2250
    %v2419 = vunpack.c.l.b16 %v2251
    %v2420 = vunpack.c.h.b16 %v2251
    %v2421 = vunpack.c.l.b16 %v2252
    %v2422 = vunpack.c.h.b16 %v2252
    %v2423 = vunpack.c.l.b16 %v2253
    %v2424 = vunpack.c.h.b16 %v2253
    %v2425 = vunpack.c.l.b16 %v2254
    %v2426 = vunpack.c.h.b16 %v2254
    %v2427 = vunpack.c.l.b16 %v2255
    %v2428 = vunpack.c.h.b16 %v2255
    %v2429 = vunpack.c.l.b16 %v2256
    %v2430 = vunpack.c.h.b16 %v2256
    %v2431 = vunpack.c.l.b16 %v2257
    %v2432 = vunpack.c.h.b16 %v2257
    %v2433 = vunpack.c.l.b16 %v2258
    %v2434 = vunpack.c.h.b16 %v2258
    %v2435 = vunpack.c.l.b16 %v2259
    %v2436 = vunpack.c.h.b16 %v2259
    %v2437 = vunpack.c.l.b16 %v2260
    %v2438 = vunpack.c.h.b16 %v2260
    %v2439 = vunpack.c.l.b16 %v2261
    %v2440 = vunpack.c.h.b16 %v2261
    %v2441 = vunpack.c.l.b16 %v2262
    %v2442 = vunpack.c.h.b16 %v2262
    %v2443 = vunpack.c.l.b16 %v2263
    %v2444 = vunpack.c.h.b16 %v2263
    %v2445 = vunpack.c.l.b16 %v2264
    %v2446 = vunpack.c.h.b16 %v2264
    %v2447 = vunpack.c.l.b16 %v2265
    %v2448 = vunpack.c.h.b16 %v2265
    %v2449 = vunpack.c.l.b16 %v2266
    %v2450 = vunpack.c.h.b16 %v2266
    %v2451 = vunpack.c.l.b16 %v2267
    %v2452 = vunpack.c.h.b16 %v2267
    %v2453 = vunpack.c.l.b16 %v2268
    %v2454 = vunpack.c.h.b16 %v2268
    %v2455 = vunpack.c.l.b16 %v2269
    %v2456 = vunpack.c.h.b16 %v2269
    %v2457 = vunpack.c.l.b16 %v2270
    %v2458 = vunpack.c.h.b16 %v2270
    %v2459 = vunpack.c.l.b16 %v2271
    %v2460 = vunpack.c.h.b16 %v2271
    %v2461 = vunpack.c.l.b16 %v2272
    %v2462 = vunpack.c.h.b16 %v2272
    %v2463 = vunpack.c.l.b16 %v2273
    %v2464 = vunpack.c.h.b16 %v2273
    %v2465 = vunpack.c.l.b16 %v2274
    %v2466 = vunpack.c.h.b16 %v2274
    %v2467 = vpack.c.b16 %v2341, %v2339
    %v2468 = vpack.c.b16 %v2342, %v2340
    %v2469 = vpack.c.b16 %v2345, %v2343
    %v2470 = vpack.c.b16 %v2346, %v2344
    %v2471 = vpack.c.b16 %v2349, %v2347
    %v2472 = vpack.c.b16 %v2350, %v2348
    %v2473 = vpack.c.b16 %v2353, %v2351
    %v2474 = vpack.c.b16 %v2354, %v2352
    %v2475 = vpack.c.b16 %v2357, %v2355
    %v2476 = vpack.c.b16 %v2358, %v2356
    %v2477 = vpack.c.b16 %v2361, %v2359
    %v2478 = vpack.c.b16 %v2362, %v2360
    %v2479 = vpack.c.b16 %v2365, %v2363
    %v2480 = vpack.c.b16 %v2366, %v2364
    %v2481 = vpack.c.b16 %v2369, %v2367
    %v2482 = vpack.c.b16 %v2370, %v2368
    %v2483 = vpack.c.b16 %v2373, %v2371
    %v2484 = vpack.c.b16 %v2374, %v2372
    %v2485 = vpack.c.b16 %v2377, %v2375
    %v2486 = vpack.c.b16 %v2378, %v2376
    %v2487 = vpack.c.b16 %v2381, %v2379
    %v2488 = vpack.c.b16 %v2382, %v2380
    %v2489 = vpack.c.b16 %v2385, %v2383
    %v2490 = vpack.c.b16 %v2386, %v2384
    %v2491 = vpack.c.b16 %v2389, %v2387
    %v2492 = vpack.c.b16 %v2390, %v2388
    %v2493 = vpack.c.b16 %v2393, %v2391
    %v2494 = vpack.c.b16 %v2394, %v2392
    %v2495 = vpack.c.b16 %v2397, %v2395
    %v2496 = vpack.c.b16 %v2398, %v2396
    %v2497 = vpack.c.b16 %v2401, %v2399
    %v2498 = vpack.c.b16 %v2402, %v2400
    %v2499 = vpack.c.b16 %v2405, %v2403
    %v2500 = vpack.c.b16 %v2406, %v2404
    %v2501 = vpack.c.b16 %v2409, %v2407
    %v2502 = vpack.c.b16 %v2410, %v2408
    %v2503 = vpack.c.b16 %v2413, %v2411
    %v2504 = vpack.c.b16 %v2414, %v2412
    %v2505 = vpack.c.b16 %v2417, %v2415
    %v2506 = vpack.c.b16 %v2418, %v2416
    %v2507 = vpack.c.b16 %v2421, %v2419
    %v2508 = vpack.c.b16 %v2422, %v2420
    %v2509 = vpack.c.b16 %v2425, %v2423
    %v2510 = vpack.c.b16 %v2426, %v2424
    %v2511 = vpack.c.b16 %v2429, %v2427
    %v2512 = vpack.c.b16 %v2430, %v2428
    %v2513 = vpack.c.b16 %v2433, %v2431
    %v2514 = vpack.c.b16 %v2434, %v2432
    %v2515 = vpack.c.b16 %v2437, %v2435
    %v2516 = vpack.c.b16 %v2438, %v2436
    %v2517 = vpack.c.b16 %v2441, %v2439
    %v2518 = vpack.c.b16 %v2442, %v2440
    %v2519 = vpack.c.b16 %v2445, %v2443
    %v2520 = vpack.c.b16 %v2446, %v2444
    %v2521 = vpack.c.b16 %v2449, %v2447
    %v2522 = vpack.c.b16 %v2450, %v2448
    %v2523 = vpack.c.b16 %v2453, %v2451
    %v2524 = vpack.c.b16 %v2454, %v2452
    %v2525 = vpack.c.b16 %v2457, %v2455
    %v2526 = vpack.c.b16 %v2458, %v2456
    %v2527 = vpack.c.b16 %v2461, %v2459
    %v2528 = vpack.c.b16 %v2462, %v2460
    %v2529 = vpack.c.b16 %v2465, %v2463
    %v2530 = vpack.c.b16 %v2466, %v2464
    %2595 = vmatpush.bf16.msra.mxu0 %v2481
    %2596 = vmatpush.bf16.msra.mxu0 %v2479
    %2597 = vmatpush.bf16.msra.mxu0 %v2477
    %2598 = vmatpush.bf16.msra.mxu0 %v2475
    %2599 = vmatpush.bf16.msra.mxu0 %v2473
    %2600 = vmatpush.bf16.msra.mxu0 %v2471
    %2601 = vmatpush.bf16.msra.mxu0 %v2469
    %2602 = vmatpush.bf16.msra.mxu0 %v2467
    %2603 = vmatmul.bf16.gmra.mxu0 %v2179
    %v2604 = vpop.f32.mrf.mxu0
    %v2605 = vadd.f32 0.0, %v2604
    %v2606 = vpop.f32.mrf.mxu0
    %v2607 = vadd.f32 0.0, %v2606
    %2608 = vmatmul.bf16.gmra.mxu0 %v2183
    %v2609 = vpop.f32.mrf.mxu0
    %v2610 = vadd.f32 0.0, %v2609
    %v2611 = vpop.f32.mrf.mxu0
    %v2612 = vadd.f32 0.0, %v2611
    %2613 = vmatmul.bf16.gmra.mxu0 %v2187
    %v2614 = vpop.f32.mrf.mxu0
    %v2615 = vadd.f32 0.0, %v2614
    %v2616 = vpop.f32.mrf.mxu0
    %v2617 = vadd.f32 0.0, %v2616
    %2618 = vmatmul.bf16.gmra.mxu0 %v2191
    %v2619 = vpop.f32.mrf.mxu0
    %v2620 = vadd.f32 0.0, %v2619
    %v2621 = vpop.f32.mrf.mxu0
    %v2622 = vadd.f32 0.0, %v2621
    %2623 = vmatmul.bf16.gmra.mxu0 %v2195
    %v2624 = vpop.f32.mrf.mxu0
    %v2625 = vadd.f32 0.0, %v2624
    %v2626 = vpop.f32.mrf.mxu0
    %v2627 = vadd.f32 0.0, %v2626
    %2628 = vmatmul.bf16.gmra.mxu0 %v2199
    %v2629 = vpop.f32.mrf.mxu0
    %v2630 = vadd.f32 0.0, %v2629
    %v2631 = vpop.f32.mrf.mxu0
    %v2632 = vadd.f32 0.0, %v2631
    %2633 = vmatmul.bf16.gmra.mxu0 %v2203
    %v2634 = vpop.f32.mrf.mxu0
    %v2635 = vadd.f32 0.0, %v2634
    %v2636 = vpop.f32.mrf.mxu0
    %v2637 = vadd.f32 0.0, %v2636
    %2638 = vmatmul.bf16.gmra.mxu0 %v2207
    %v2639 = vpop.f32.mrf.mxu0
    %v2640 = vadd.f32 0.0, %v2639
    %v2641 = vpop.f32.mrf.mxu0
    %v2642 = vadd.f32 0.0, %v2641
    %2643 = vdwg.mxu0
    %2644 = vmatpush.bf16.msra.mxu0 %v2497
    %2645 = vmatpush.bf16.msra.mxu0 %v2495
    %2646 = vmatpush.bf16.msra.mxu0 %v2493
    %2647 = vmatpush.bf16.msra.mxu0 %v2491
    %2648 = vmatpush.bf16.msra.mxu0 %v2489
    %2649 = vmatpush.bf16.msra.mxu0 %v2487
    %2650 = vmatpush.bf16.msra.mxu0 %v2485
    %2651 = vmatpush.bf16.msra.mxu0 %v2483
    %2652 = vmatmul.bf16.gmra.mxu0 %v2180
    %v2653 = vpop.f32.mrf.mxu0
    %v2654 = vadd.f32 %v2605, %v2653
    %v2655 = vpop.f32.mrf.mxu0
    %v2656 = vadd.f32 %v2607, %v2655
    %2657 = vmatmul.bf16.gmra.mxu0 %v2184
    %v2658 = vpop.f32.mrf.mxu0
    %v2659 = vadd.f32 %v2610, %v2658
    %v2660 = vpop.f32.mrf.mxu0
    %v2661 = vadd.f32 %v2612, %v2660
    %2662 = vmatmul.bf16.gmra.mxu0 %v2188
    %v2663 = vpop.f32.mrf.mxu0
    %v2664 = vadd.f32 %v2615, %v2663
    %v2665 = vpop.f32.mrf.mxu0
    %v2666 = vadd.f32 %v2617, %v2665
    %2667 = vmatmul.bf16.gmra.mxu0 %v2192
    %v2668 = vpop.f32.mrf.mxu0
    %v2669 = vadd.f32 %v2620, %v2668
    %v2670 = vpop.f32.mrf.mxu0
    %v2671 = vadd.f32 %v2622, %v2670
    %2672 = vmatmul.bf16.gmra.mxu0 %v2196
    %v2673 = vpop.f32.mrf.mxu0
    %v2674 = vadd.f32 %v2625, %v2673
    %v2675 = vpop.f32.mrf.mxu0
    %v2676 = vadd.f32 %v2627, %v2675
    %2677 = vmatmul.bf16.gmra.mxu0 %v2200
    %v2678 = vpop.f32.mrf.mxu0
    %v2679 = vadd.f32 %v2630, %v2678
    %v2680 = vpop.f32.mrf.mxu0
    %v2681 = vadd.f32 %v2632, %v2680
    %2682 = vmatmul.bf16.gmra.mxu0 %v2204
    %v2683 = vpop.f32.mrf.mxu0
    %v2684 = vadd.f32 %v2635, %v2683
    %v2685 = vpop.f32.mrf.mxu0
    %v2686 = vadd.f32 %v2637, %v2685
    %2687 = vmatmul.bf16.gmra.mxu0 %v2208
    %v2688 = vpop.f32.mrf.mxu0
    %v2689 = vadd.f32 %v2640, %v2688
    %v2690 = vpop.f32.mrf.mxu0
    %v2691 = vadd.f32 %v2642, %v2690
    %2692 = vdwg.mxu0
    %2693 = vmatpush.bf16.msra.mxu0 %v2513
    %2694 = vmatpush.bf16.msra.mxu0 %v2511
    %2695 = vmatpush.bf16.msra.mxu0 %v2509
    %2696 = vmatpush.bf16.msra.mxu0 %v2507
    %2697 = vmatpush.bf16.msra.mxu0 %v2505
    %2698 = vmatpush.bf16.msra.mxu0 %v2503
    %2699 = vmatpush.bf16.msra.mxu0 %v2501
    %2700 = vmatpush.bf16.msra.mxu0 %v2499
    %2701 = vmatmul.bf16.gmra.mxu0 %v2181
    %v2702 = vpop.f32.mrf.mxu0
    %v2703 = vadd.f32 %v2654, %v2702
    %v2704 = vpop.f32.mrf.mxu0
    %v2705 = vadd.f32 %v2656, %v2704
    %2706 = vmatmul.bf16.gmra.mxu0 %v2185
    %v2707 = vpop.f32.mrf.mxu0
    %v2708 = vadd.f32 %v2659, %v2707
    %v2709 = vpop.f32.mrf.mxu0
    %v2710 = vadd.f32 %v2661, %v2709
    %2711 = vmatmul.bf16.gmra.mxu0 %v2189
    %v2712 = vpop.f32.mrf.mxu0
    %v2713 = vadd.f32 %v2664, %v2712
    %v2714 = vpop.f32.mrf.mxu0
    %v2715 = vadd.f32 %v2666, %v2714
    %2716 = vmatmul.bf16.gmra.mxu0 %v2193
    %v2717 = vpop.f32.mrf.mxu0
    %v2718 = vadd.f32 %v2669, %v2717
    %v2719 = vpop.f32.mrf.mxu0
    %v2720 = vadd.f32 %v2671, %v2719
    %2721 = vmatmul.bf16.gmra.mxu0 %v2197
    %v2722 = vpop.f32.mrf.mxu0
    %v2723 = vadd.f32 %v2674, %v2722
    %v2724 = vpop.f32.mrf.mxu0
    %v2725 = vadd.f32 %v2676, %v2724
    %2726 = vmatmul.bf16.gmra.mxu0 %v2201
    %v2727 = vpop.f32.mrf.mxu0
    %v2728 = vadd.f32 %v2679, %v2727
    %v2729 = vpop.f32.mrf.mxu0
    %v2730 = vadd.f32 %v2681, %v2729
    %2731 = vmatmul.bf16.gmra.mxu0 %v2205
    %v2732 = vpop.f32.mrf.mxu0
    %v2733 = vadd.f32 %v2684, %v2732
    %v2734 = vpop.f32.mrf.mxu0
    %v2735 = vadd.f32 %v2686, %v2734
    %2736 = vmatmul.bf16.gmra.mxu0 %v2209
    %v2737 = vpop.f32.mrf.mxu0
    %v2738 = vadd.f32 %v2689, %v2737
    %v2739 = vpop.f32.mrf.mxu0
    %v2740 = vadd.f32 %v2691, %v2739
    %2741 = vdwg.mxu0
    %2742 = vmatpush.bf16.msra.mxu0 %v2529
    %2743 = vmatpush.bf16.msra.mxu0 %v2527
    %2744 = vmatpush.bf16.msra.mxu0 %v2525
    %2745 = vmatpush.bf16.msra.mxu0 %v2523
    %2746 = vmatpush.bf16.msra.mxu0 %v2521
    %2747 = vmatpush.bf16.msra.mxu0 %v2519
    %2748 = vmatpush.bf16.msra.mxu0 %v2517
    %2749 = vmatpush.bf16.msra.mxu0 %v2515
    %2750 = vmatmul.bf16.gmra.mxu0 %v2182
    %v2751 = vpop.f32.mrf.mxu0
    %v2752 = vadd.f32 %v2703, %v2751
    %v2753 = vpop.f32.mrf.mxu0
    %v2754 = vadd.f32 %v2705, %v2753
    %2755 = vmatmul.bf16.gmra.mxu0 %v2186
    %v2756 = vpop.f32.mrf.mxu0
    %v2757 = vadd.f32 %v2708, %v2756
    %v2758 = vpop.f32.mrf.mxu0
    %v2759 = vadd.f32 %v2710, %v2758
    %2760 = vmatmul.bf16.gmra.mxu0 %v2190
    %v2761 = vpop.f32.mrf.mxu0
    %v2762 = vadd.f32 %v2713, %v2761
    %v2763 = vpop.f32.mrf.mxu0
    %v2764 = vadd.f32 %v2715, %v2763
    %2765 = vmatmul.bf16.gmra.mxu0 %v2194
    %v2766 = vpop.f32.mrf.mxu0
    %v2767 = vadd.f32 %v2718, %v2766
    %v2768 = vpop.f32.mrf.mxu0
    %v2769 = vadd.f32 %v2720, %v2768
    %2770 = vmatmul.bf16.gmra.mxu0 %v2198
    %v2771 = vpop.f32.mrf.mxu0
    %v2772 = vadd.f32 %v2723, %v2771
    %v2773 = vpop.f32.mrf.mxu0
    %v2774 = vadd.f32 %v2725, %v2773
    %2775 = vmatmul.bf16.gmra.mxu0 %v2202
    %v2776 = vpop.f32.mrf.mxu0
    %v2777 = vadd.f32 %v2728, %v2776
    %v2778 = vpop.f32.mrf.mxu0
    %v2779 = vadd.f32 %v2730, %v2778
    %2780 = vmatmul.bf16.gmra.mxu0 %v2206
    %v2781 = vpop.f32.mrf.mxu0
    %v2782 = vadd.f32 %v2733, %v2781
    %v2783 = vpop.f32.mrf.mxu0
    %v2784 = vadd.f32 %v2735, %v2783
    %2785 = vmatmul.bf16.gmra.mxu0 %v2210
    %v2786 = vpop.f32.mrf.mxu0
    %v2787 = vadd.f32 %v2738, %v2786
    %v2788 = vpop.f32.mrf.mxu0
    %v2789 = vadd.f32 %v2740, %v2788
    %2790 = vdwg.mxu0
    %2791 = vmatpush.bf16.msra.mxu0 %v2482
    %2792 = vmatpush.bf16.msra.mxu0 %v2480
    %2793 = vmatpush.bf16.msra.mxu0 %v2478
    %2794 = vmatpush.bf16.msra.mxu0 %v2476
    %2795 = vmatpush.bf16.msra.mxu0 %v2474
    %2796 = vmatpush.bf16.msra.mxu0 %v2472
    %2797 = vmatpush.bf16.msra.mxu0 %v2470
    %2798 = vmatpush.bf16.msra.mxu0 %v2468
    %2799 = vmatmul.bf16.gmra.mxu0 %v2179
    %v2800 = vpop.f32.mrf.mxu0
    %v2801 = vadd.f32 0.0, %v2800
    %v2802 = vpop.f32.mrf.mxu0
    %v2803 = vadd.f32 0.0, %v2802
    %2804 = vmatmul.bf16.gmra.mxu0 %v2183
    %v2805 = vpop.f32.mrf.mxu0
    %v2806 = vadd.f32 0.0, %v2805
    %v2807 = vpop.f32.mrf.mxu0
    %v2808 = vadd.f32 0.0, %v2807
    %2809 = vmatmul.bf16.gmra.mxu0 %v2187
    %v2810 = vpop.f32.mrf.mxu0
    %v2811 = vadd.f32 0.0, %v2810
    %v2812 = vpop.f32.mrf.mxu0
    %v2813 = vadd.f32 0.0, %v2812
    %2814 = vmatmul.bf16.gmra.mxu0 %v2191
    %v2815 = vpop.f32.mrf.mxu0
    %v2816 = vadd.f32 0.0, %v2815
    %v2817 = vpop.f32.mrf.mxu0
    %v2818 = vadd.f32 0.0, %v2817
    %2819 = vmatmul.bf16.gmra.mxu0 %v2195
    %v2820 = vpop.f32.mrf.mxu0
    %v2821 = vadd.f32 0.0, %v2820
    %v2822 = vpop.f32.mrf.mxu0
    %v2823 = vadd.f32 0.0, %v2822
    %2824 = vmatmul.bf16.gmra.mxu0 %v2199
    %v2825 = vpop.f32.mrf.mxu0
    %v2826 = vadd.f32 0.0, %v2825
    %v2827 = vpop.f32.mrf.mxu0
    %v2828 = vadd.f32 0.0, %v2827
    %2829 = vmatmul.bf16.gmra.mxu0 %v2203
    %v2830 = vpop.f32.mrf.mxu0
    %v2831 = vadd.f32 0.0, %v2830
    %v2832 = vpop.f32.mrf.mxu0
    %v2833 = vadd.f32 0.0, %v2832
    %2834 = vmatmul.bf16.gmra.mxu0 %v2207
    %v2835 = vpop.f32.mrf.mxu0
    %v2836 = vadd.f32 0.0, %v2835
    %v2837 = vpop.f32.mrf.mxu0
    %v2838 = vadd.f32 0.0, %v2837
    %2839 = vdwg.mxu0
    %2840 = vmatpush.bf16.msra.mxu0 %v2498
    %2841 = vmatpush.bf16.msra.mxu0 %v2496
    %2842 = vmatpush.bf16.msra.mxu0 %v2494
    %2843 = vmatpush.bf16.msra.mxu0 %v2492
    %2844 = vmatpush.bf16.msra.mxu0 %v2490
    %2845 = vmatpush.bf16.msra.mxu0 %v2488
    %2846 = vmatpush.bf16.msra.mxu0 %v2486
    %2847 = vmatpush.bf16.msra.mxu0 %v2484
    %2848 = vmatmul.bf16.gmra.mxu0 %v2180
    %v2849 = vpop.f32.mrf.mxu0
    %v2850 = vadd.f32 %v2801, %v2849
    %v2851 = vpop.f32.mrf.mxu0
    %v2852 = vadd.f32 %v2803, %v2851
    %2853 = vmatmul.bf16.gmra.mxu0 %v2184
    %v2854 = vpop.f32.mrf.mxu0
    %v2855 = vadd.f32 %v2806, %v2854
    %v2856 = vpop.f32.mrf.mxu0
    %v2857 = vadd.f32 %v2808, %v2856
    %2858 = vmatmul.bf16.gmra.mxu0 %v2188
    %v2859 = vpop.f32.mrf.mxu0
    %v2860 = vadd.f32 %v2811, %v2859
    %v2861 = vpop.f32.mrf.mxu0
    %v2862 = vadd.f32 %v2813, %v2861
    %2863 = vmatmul.bf16.gmra.mxu0 %v2192
    %v2864 = vpop.f32.mrf.mxu0
    %v2865 = vadd.f32 %v2816, %v2864
    %v2866 = vpop.f32.mrf.mxu0
    %v2867 = vadd.f32 %v2818, %v2866
    %2868 = vmatmul.bf16.gmra.mxu0 %v2196
    %v2869 = vpop.f32.mrf.mxu0
    %v2870 = vadd.f32 %v2821, %v2869
    %v2871 = vpop.f32.mrf.mxu0
    %v2872 = vadd.f32 %v2823, %v2871
    %2873 = vmatmul.bf16.gmra.mxu0 %v2200
    %v2874 = vpop.f32.mrf.mxu0
    %v2875 = vadd.f32 %v2826, %v2874
    %v2876 = vpop.f32.mrf.mxu0
    %v2877 = vadd.f32 %v2828, %v2876
    %2878 = vmatmul.bf16.gmra.mxu0 %v2204
    %v2879 = vpop.f32.mrf.mxu0
    %v2880 = vadd.f32 %v2831, %v2879
    %v2881 = vpop.f32.mrf.mxu0
    %v2882 = vadd.f32 %v2833, %v2881
    %2883 = vmatmul.bf16.gmra.mxu0 %v2208
    %v2884 = vpop.f32.mrf.mxu0
    %v2885 = vadd.f32 %v2836, %v2884
    %v2886 = vpop.f32.mrf.mxu0
    %v2887 = vadd.f32 %v2838, %v2886
    %2888 = vdwg.mxu0
    %2889 = vmatpush.bf16.msra.mxu0 %v2514
    %2890 = vmatpush.bf16.msra.mxu0 %v2512
    %2891 = vmatpush.bf16.msra.mxu0 %v2510
    %2892 = vmatpush.bf16.msra.mxu0 %v2508
    %2893 = vmatpush.bf16.msra.mxu0 %v2506
    %2894 = vmatpush.bf16.msra.mxu0 %v2504
    %2895 = vmatpush.bf16.msra.mxu0 %v2502
    %2896 = vmatpush.bf16.msra.mxu0 %v2500
    %2897 = vmatmul.bf16.gmra.mxu0 %v2181
    %v2898 = vpop.f32.mrf.mxu0
    %v2899 = vadd.f32 %v2850, %v2898
    %v2900 = vpop.f32.mrf.mxu0
    %v2901 = vadd.f32 %v2852, %v2900
    %2902 = vmatmul.bf16.gmra.mxu0 %v2185
    %v2903 = vpop.f32.mrf.mxu0
    %v2904 = vadd.f32 %v2855, %v2903
    %v2905 = vpop.f32.mrf.mxu0
    %v2906 = vadd.f32 %v2857, %v2905
    %2907 = vmatmul.bf16.gmra.mxu0 %v2189
    %v2908 = vpop.f32.mrf.mxu0
    %v2909 = vadd.f32 %v2860, %v2908
    %v2910 = vpop.f32.mrf.mxu0
    %v2911 = vadd.f32 %v2862, %v2910
    %2912 = vmatmul.bf16.gmra.mxu0 %v2193
    %v2913 = vpop.f32.mrf.mxu0
    %v2914 = vadd.f32 %v2865, %v2913
    %v2915 = vpop.f32.mrf.mxu0
    %v2916 = vadd.f32 %v2867, %v2915
    %2917 = vmatmul.bf16.gmra.mxu0 %v2197
    %v2918 = vpop.f32.mrf.mxu0
    %v2919 = vadd.f32 %v2870, %v2918
    %v2920 = vpop.f32.mrf.mxu0
    %v2921 = vadd.f32 %v2872, %v2920
    %2922 = vmatmul.bf16.gmra.mxu0 %v2201
    %v2923 = vpop.f32.mrf.mxu0
    %v2924 = vadd.f32 %v2875, %v2923
    %v2925 = vpop.f32.mrf.mxu0
    %v2926 = vadd.f32 %v2877, %v2925
    %2927 = vmatmul.bf16.gmra.mxu0 %v2205
    %v2928 = vpop.f32.mrf.mxu0
    %v2929 = vadd.f32 %v2880, %v2928
    %v2930 = vpop.f32.mrf.mxu0
    %v2931 = vadd.f32 %v2882, %v2930
    %2932 = vmatmul.bf16.gmra.mxu0 %v2209
    %v2933 = vpop.f32.mrf.mxu0
    %v2934 = vadd.f32 %v2885, %v2933
    %v2935 = vpop.f32.mrf.mxu0
    %v2936 = vadd.f32 %v2887, %v2935
    %2937 = vdwg.mxu0
    %2938 = vmatpush.bf16.msra.mxu0 %v2530
    %2939 = vmatpush.bf16.msra.mxu0 %v2528
    %2940 = vmatpush.bf16.msra.mxu0 %v2526
    %2941 = vmatpush.bf16.msra.mxu0 %v2524
    %2942 = vmatpush.bf16.msra.mxu0 %v2522
    %2943 = vmatpush.bf16.msra.mxu0 %v2520
    %2944 = vmatpush.bf16.msra.mxu0 %v2518
    %2945 = vmatpush.bf16.msra.mxu0 %v2516
    %2946 = vmatmul.bf16.gmra.mxu0 %v2182
    %v2947 = vpop.f32.mrf.mxu0
    %v2948 = vadd.f32 %v2899, %v2947
    %v2949 = vpop.f32.mrf.mxu0
    %v2950 = vadd.f32 %v2901, %v2949
    %2951 = vmatmul.bf16.gmra.mxu0 %v2186
    %v2952 = vpop.f32.mrf.mxu0
    %v2953 = vadd.f32 %v2904, %v2952
    %v2954 = vpop.f32.mrf.mxu0
    %v2955 = vadd.f32 %v2906, %v2954
    %2956 = vmatmul.bf16.gmra.mxu0 %v2190
    %v2957 = vpop.f32.mrf.mxu0
    %v2958 = vadd.f32 %v2909, %v2957
    %v2959 = vpop.f32.mrf.mxu0
    %v2960 = vadd.f32 %v2911, %v2959
    %2961 = vmatmul.bf16.gmra.mxu0 %v2194
    %v2962 = vpop.f32.mrf.mxu0
    %v2963 = vadd.f32 %v2914, %v2962
    %v2964 = vpop.f32.mrf.mxu0
    %v2965 = vadd.f32 %v2916, %v2964
    %2966 = vmatmul.bf16.gmra.mxu0 %v2198
    %v2967 = vpop.f32.mrf.mxu0
    %v2968 = vadd.f32 %v2919, %v2967
    %v2969 = vpop.f32.mrf.mxu0
    %v2970 = vadd.f32 %v2921, %v2969
    %2971 = vmatmul.bf16.gmra.mxu0 %v2202
    %v2972 = vpop.f32.mrf.mxu0
    %v2973 = vadd.f32 %v2924, %v2972
    %v2974 = vpop.f32.mrf.mxu0
    %v2975 = vadd.f32 %v2926, %v2974
    %2976 = vmatmul.bf16.gmra.mxu0 %v2206
    %v2977 = vpop.f32.mrf.mxu0
    %v2978 = vadd.f32 %v2929, %v2977
    %v2979 = vpop.f32.mrf.mxu0
    %v2980 = vadd.f32 %v2931, %v2979
    %2981 = vmatmul.bf16.gmra.mxu0 %v2210
    %v2982 = vpop.f32.mrf.mxu0
    %v2983 = vadd.f32 %v2934, %v2982
    %v2984 = vpop.f32.mrf.mxu0
    %v2985 = vadd.f32 %v2936, %v2984
    %2986 = vdwg.mxu0
    %v2987 = vadd.f32 %v2147, %v2752
    %v2988 = vadd.f32 %v2148, %v2948
    %v2989 = vadd.f32 %v2149, %v2754
    %v2990 = vadd.f32 %v2150, %v2950
    %v2991 = vadd.f32 %v2151, %v2757
    %v2992 = vadd.f32 %v2152, %v2953
    %v2993 = vadd.f32 %v2153, %v2759
    %v2994 = vadd.f32 %v2154, %v2955
    %v2995 = vadd.f32 %v2155, %v2762
    %v2996 = vadd.f32 %v2156, %v2958
    %v2997 = vadd.f32 %v2157, %v2764
    %v2998 = vadd.f32 %v2158, %v2960
    %v2999 = vadd.f32 %v2159, %v2767
    %v3000 = vadd.f32 %v2160, %v2963
    %v3001 = vadd.f32 %v2161, %v2769
    %v3002 = vadd.f32 %v2162, %v2965
    %v3003 = vadd.f32 %v2163, %v2772
    %v3004 = vadd.f32 %v2164, %v2968
    %v3005 = vadd.f32 %v2165, %v2774
    %v3006 = vadd.f32 %v2166, %v2970
    %v3007 = vadd.f32 %v2167, %v2777
    %v3008 = vadd.f32 %v2168, %v2973
    %v3009 = vadd.f32 %v2169, %v2779
    %v3010 = vadd.f32 %v2170, %v2975
    %v3011 = vadd.f32 %v2171, %v2782
    %v3012 = vadd.f32 %v2172, %v2978
    %v3013 = vadd.f32 %v2173, %v2784
    %v3014 = vadd.f32 %v2174, %v2980
    %v3015 = vadd.f32 %v2175, %v2787
    %v3016 = vadd.f32 %v2176, %v2983
    %v3017 = vadd.f32 %v2177, %v2789
    %v3018 = vadd.f32 %v2178, %v2985
    %3019 = vst [vmem:[#allocation2] sm:$0xff] %v2987
    %3020 = vst [vmem:[#allocation2 + $0x8] sm:$0xff] %v2988
    %3021 = vst [vmem:[#allocation2 + $0x10] sm:$0xff] %v2989
    %3022 = vst [vmem:[#allocation2 + $0x18] sm:$0xff] %v2990
    %3023 = vst [vmem:[#allocation2 + $0x20] sm:$0xff] %v2991
    %3024 = vst [vmem:[#allocation2 + $0x28] sm:$0xff] %v2992
    %3025 = vst [vmem:[#allocation2 + $0x30] sm:$0xff] %v2993
    %3026 = vst [vmem:[#allocation2 + $0x38] sm:$0xff] %v2994
    %3027 = vst [vmem:[#allocation2 + $0x40] sm:$0xff] %v2995
    %3028 = vst [vmem:[#allocation2 + $0x48] sm:$0xff] %v2996
    %3029 = vst [vmem:[#allocation2 + $0x50] sm:$0xff] %v2997
    %3030 = vst [vmem:[#allocation2 + $0x58] sm:$0xff] %v2998
    %3031 = vst [vmem:[#allocation2 + $0x60] sm:$0xff] %v2999
    %3032 = vst [vmem:[#allocation2 + $0x68] sm:$0xff] %v3000
    %3033 = vst [vmem:[#allocation2 + $0x70] sm:$0xff] %v3001
    %3034 = vst [vmem:[#allocation2 + $0x78] sm:$0xff] %v3002
    %3035 = vst [vmem:[#allocation2 + $0x80] sm:$0xff] %v3003
    %3036 = vst [vmem:[#allocation2 + $0x88] sm:$0xff] %v3004
    %3037 = vst [vmem:[#allocation2 + $0x90] sm:$0xff] %v3005
    %3038 = vst [vmem:[#allocation2 + $0x98] sm:$0xff] %v3006
    %3039 = vst [vmem:[#allocation2 + $0xa0] sm:$0xff] %v3007
    %3040 = vst [vmem:[#allocation2 + $0xa8] sm:$0xff] %v3008
    %3041 = vst [vmem:[#allocation2 + $0xb0] sm:$0xff] %v3009
    %3042 = vst [vmem:[#allocation2 + $0xb8] sm:$0xff] %v3010
    %3043 = vst [vmem:[#allocation2 + $0xc0] sm:$0xff] %v3011
    %3044 = vst [vmem:[#allocation2 + $0xc8] sm:$0xff] %v3012
    %3045 = vst [vmem:[#allocation2 + $0xd0] sm:$0xff] %v3013
    %3046 = vst [vmem:[#allocation2 + $0xd8] sm:$0xff] %v3014
    %3047 = vst [vmem:[#allocation2 + $0xe0] sm:$0xff] %v3015
    %3048 = vst [vmem:[#allocation2 + $0xe8] sm:$0xff] %v3016
    %3049 = vst [vmem:[#allocation2 + $0xf0] sm:$0xff] %v3017
    %3050 = vst [vmem:[#allocation2 + $0xf8] sm:$0xff] %v3018
    // Predicated region
    $region18: #{_mlp_impl.1} parent=1 // pred_check
      %p3051 = pneg %p15
    $region19: #{_mlp_impl.1} parent=1 // pred_check_branch
      %3053 = sbr.rel (%p3051) target = $region21
    $region20: #{_mlp_impl.1} parent=1 // pred_region
      %v3054 = vld [vmem:[#allocation2] sm:$0xff]
      %v3055 = vld [vmem:[#allocation2 + $0x8] sm:$0xff]
      %v3056 = vld [vmem:[#allocation2 + $0x10] sm:$0xff]
      %v3057 = vld [vmem:[#allocation2 + $0x18] sm:$0xff]
      %v3058 = vld [vmem:[#allocation2 + $0x20] sm:$0xff]
      %v3059 = vld [vmem:[#allocation2 + $0x28] sm:$0xff]
      %v3060 = vld [vmem:[#allocation2 + $0x30] sm:$0xff]
      %v3061 = vld [vmem:[#allocation2 + $0x38] sm:$0xff]
      %v3062 = vld [vmem:[#allocation2 + $0x40] sm:$0xff]
      %v3063 = vld [vmem:[#allocation2 + $0x48] sm:$0xff]
      %v3064 = vld [vmem:[#allocation2 + $0x50] sm:$0xff]
      %v3065 = vld [vmem:[#allocation2 + $0x58] sm:$0xff]
      %v3066 = vld [vmem:[#allocation2 + $0x60] sm:$0xff]
      %v3067 = vld [vmem:[#allocation2 + $0x68] sm:$0xff]
      %v3068 = vld [vmem:[#allocation2 + $0x70] sm:$0xff]
      %v3069 = vld [vmem:[#allocation2 + $0x78] sm:$0xff]
      %v3070 = vld [vmem:[#allocation2 + $0x80] sm:$0xff]
      %v3071 = vld [vmem:[#allocation2 + $0x88] sm:$0xff]
      %v3072 = vld [vmem:[#allocation2 + $0x90] sm:$0xff]
      %v3073 = vld [vmem:[#allocation2 + $0x98] sm:$0xff]
      %v3074 = vld [vmem:[#allocation2 + $0xa0] sm:$0xff]
      %v3075 = vld [vmem:[#allocation2 + $0xa8] sm:$0xff]
      %v3076 = vld [vmem:[#allocation2 + $0xb0] sm:$0xff]
      %v3077 = vld [vmem:[#allocation2 + $0xb8] sm:$0xff]
      %v3078 = vld [vmem:[#allocation2 + $0xc0] sm:$0xff]
      %v3079 = vld [vmem:[#allocation2 + $0xc8] sm:$0xff]
      %v3080 = vld [vmem:[#allocation2 + $0xd0] sm:$0xff]
      %v3081 = vld [vmem:[#allocation2 + $0xd8] sm:$0xff]
      %v3082 = vld [vmem:[#allocation2 + $0xe0] sm:$0xff]
      %v3083 = vld [vmem:[#allocation2 + $0xe8] sm:$0xff]
      %v3084 = vld [vmem:[#allocation2 + $0xf0] sm:$0xff]
      %v3085 = vld [vmem:[#allocation2 + $0xf8] sm:$0xff]
      %3086 = vst [vmem:[#allocation3] sm:$0xff] %v3054
      %3087 = vst [vmem:[#allocation3 + $0x8] sm:$0xff] %v3055
      %3088 = vst [vmem:[#allocation3 + $0x10] sm:$0xff] %v3056
      %3089 = vst [vmem:[#allocation3 + $0x18] sm:$0xff] %v3057
      %3090 = vst [vmem:[#allocation3 + $0x20] sm:$0xff] %v3058
      %3091 = vst [vmem:[#allocation3 + $0x28] sm:$0xff] %v3059
      %3092 = vst [vmem:[#allocation3 + $0x30] sm:$0xff] %v3060
      %3093 = vst [vmem:[#allocation3 + $0x38] sm:$0xff] %v3061
      %3094 = vst [vmem:[#allocation3 + $0x40] sm:$0xff] %v3062
      %3095 = vst [vmem:[#allocation3 + $0x48] sm:$0xff] %v3063
      %3096 = vst [vmem:[#allocation3 + $0x50] sm:$0xff] %v3064
      %3097 = vst [vmem:[#allocation3 + $0x58] sm:$0xff] %v3065
      %3098 = vst [vmem:[#allocation3 + $0x60] sm:$0xff] %v3066
      %3099 = vst [vmem:[#allocation3 + $0x68] sm:$0xff] %v3067
      %3100 = vst [vmem:[#allocation3 + $0x70] sm:$0xff] %v3068
      %3101 = vst [vmem:[#allocation3 + $0x78] sm:$0xff] %v3069
      %3102 = vst [vmem:[#allocation3 + $0x80] sm:$0xff] %v3070
      %3103 = vst [vmem:[#allocation3 + $0x88] sm:$0xff] %v3071
      %3104 = vst [vmem:[#allocation3 + $0x90] sm:$0xff] %v3072
      %3105 = vst [vmem:[#allocation3 + $0x98] sm:$0xff] %v3073
      %3106 = vst [vmem:[#allocation3 + $0xa0] sm:$0xff] %v3074
      %3107 = vst [vmem:[#allocation3 + $0xa8] sm:$0xff] %v3075
      %3108 = vst [vmem:[#allocation3 + $0xb0] sm:$0xff] %v3076
      %3109 = vst [vmem:[#allocation3 + $0xb8] sm:$0xff] %v3077
      %3110 = vst [vmem:[#allocation3 + $0xc0] sm:$0xff] %v3078
      %3111 = vst [vmem:[#allocation3 + $0xc8] sm:$0xff] %v3079
      %3112 = vst [vmem:[#allocation3 + $0xd0] sm:$0xff] %v3080
      %3113 = vst [vmem:[#allocation3 + $0xd8] sm:$0xff] %v3081
      %3114 = vst [vmem:[#allocation3 + $0xe0] sm:$0xff] %v3082
      %3115 = vst [vmem:[#allocation3 + $0xe8] sm:$0xff] %v3083
      %3116 = vst [vmem:[#allocation3 + $0xf0] sm:$0xff] %v3084
      %3117 = vst [vmem:[#allocation3 + $0xf8] sm:$0xff] %v3085
    $region21: #{_mlp_impl.1} parent=1 // pred_fallthru
      _
    // Predicated region
    $region22: #{_mlp_impl.1} parent=1 // pred_check
      _
    $region23: #{_mlp_impl.1} parent=1 // pred_check_branch
      %3119 = sbr.rel (0) target = $region25
    $region24: #{_mlp_impl.1} parent=1 // pred_region
      %3121 = vsyncadd [#allocation4], 0
      %s3122 = sshll.u32 [#allocation3], 4
      %s3123 = int_to_ptr.vmem [resolvable:$true] %s3122
      %s3124 = sshll.u32 %s3, 4
      %s3125 = int_to_ptr.hbm [resolvable:$true] %s3124
      %3130 = dma.vmem_to_hbm [thread:$0]  %s3123, 4096, %s3125, [#allocation4], 256, 256, 16
    $region25: #{_mlp_impl.1} parent=1 // pred_fallthru
      _
    // Predicated region
    $region26: #{_mlp_impl.1} parent=1 // pred_check
      _
    $region27: #{_mlp_impl.1} parent=1 // pred_check_branch
      %3132 = sbr.rel (0) target = $region29
    $region28: #{_mlp_impl.1} parent=1 // pred_region
      %3134 = dma.done [#allocation4], 4096
    $region29: #{_mlp_impl.1} parent=1 // pred_fallthru
      _
    %3135 = vsyncpa [#allocation4], 1

</llo_original>
